<compile_context>
chip_gen: v7x
topology: tpu7x:2x2x1
jax: 0.10.0
libtpu: 0.0.40
codegen_flags: <defaults>
</compile_context>

<pallas_src>
import functools

import numpy as np
import jax
import jax.numpy as jnp
from jax.experimental import pallas as pl
from jax.experimental.pallas import tpu as pltpu


# ---------------------------------------------------------------------------
# Pallas kernels
# ---------------------------------------------------------------------------
def _gemm_bias_act_kernel(w_ref, p_ref, b_ref, o_ref, *, act):
    """out(Cout, M) = act(W(Cout,K) @ P(K,M) + b(Cout,1)); M (pixels) is lane-dense."""
    acc = jnp.dot(w_ref[...], p_ref[...], preferred_element_type=jnp.float32)
    acc = acc + b_ref[...]
    if act == "relu":
        acc = jnp.maximum(acc, 0.0)
    elif act == "tanh":
        acc = jnp.tanh(acc)
    o_ref[...] = acc


def gemm_bias_act(w, p, b, act):
    """Single-block Pallas GEMM (whole problem fits VMEM; grid=(1,))."""
    Cout, K = w.shape
    _, M = p.shape
    return pl.pallas_call(
        functools.partial(_gemm_bias_act_kernel, act=act),
        out_shape=jax.ShapeDtypeStruct((Cout, M), jnp.float32),
        grid=(1,),
        in_specs=[
            pl.BlockSpec((Cout, K), lambda i: (0, 0)),
            pl.BlockSpec((K, M), lambda i: (0, 0)),
            pl.BlockSpec((Cout, 1), lambda i: (0, 0)),
        ],
        out_specs=pl.BlockSpec((Cout, M), lambda i: (0, 0)),
        compiler_params=pltpu.CompilerParams(
            dimension_semantics=("arbitrary",)),
    )(w.astype(jnp.bfloat16), p.astype(jnp.bfloat16),
      b.reshape(Cout, 1).astype(jnp.float32))


def _heads_reparam_kernel(w_ref, p_ref, b_ref, eps_ref,
                          mu_ref, lv_ref, z_ref, *, c_half):
    """Fused mu/logvar head GEMM (concat'd weights) + ReLU + reparametrization."""
    acc = jnp.dot(w_ref[...], p_ref[...], preferred_element_type=jnp.float32)
    acc = jnp.maximum(acc + b_ref[...], 0.0)       # module applies ReLU on both heads
    mu = acc[:c_half, :]
    lv = acc[c_half:, :]
    mu_ref[...] = mu
    lv_ref[...] = lv
    z_ref[...] = eps_ref[...] * jnp.exp(lv * 0.5) + mu   # f32 VPU/EUP math


def heads_reparam(w_cat, p, b_cat, eps_flat):
    C2, K = w_cat.shape
    _, M = p.shape
    c_half = C2 // 2
    out_shapes = (jax.ShapeDtypeStruct((c_half, M), jnp.float32),) * 3
    return pl.pallas_call(
        functools.partial(_heads_reparam_kernel, c_half=c_half),
        out_shape=out_shapes,
        grid=(1,),
        in_specs=[
            pl.BlockSpec((C2, K), lambda i: (0, 0)),
            pl.BlockSpec((K, M), lambda i: (0, 0)),
            pl.BlockSpec((C2, 1), lambda i: (0, 0)),
            pl.BlockSpec((c_half, M), lambda i: (0, 0)),
        ],
        out_specs=(pl.BlockSpec((c_half, M), lambda i: (0, 0)),) * 3,
        compiler_params=pltpu.CompilerParams(
            dimension_semantics=("arbitrary",)),
    )(w_cat.astype(jnp.bfloat16), p.astype(jnp.bfloat16),
      b_cat.reshape(C2, 1).astype(jnp.float32), eps_flat.astype(jnp.float32))


# ---------------------------------------------------------------------------
# Conv / ConvTranspose lowering (im2col in channel-major CNHW layout)
# ---------------------------------------------------------------------------
def _im2col_cnhw(x_c, k, stride, pad):
    """x_c: (C, N, H, W) -> patches_T: (C*k*k, N*Ho*Wo), K-order = (ci, kh, kw)."""
    C, N, H, W = x_c.shape
    Ho = (H + 2 * pad - k) // stride + 1
    Wo = (W + 2 * pad - k) // stride + 1
    xp = jnp.pad(x_c, ((0, 0), (0, 0), (pad, pad), (pad, pad)))
    cols = [xp[:, :, kh:kh + stride * Ho:stride, kw:kw + stride * Wo:stride]
            for kh in range(k) for kw in range(k)]
    patches = jnp.stack(cols, axis=1)                       # (C, k*k, N, Ho, Wo)
    return patches.reshape(C * k * k, N * Ho * Wo), Ho, Wo


def conv2d_cnhw(x_c, w, b, stride, pad, act):
    """x_c: (Cin, N, H, W); w: (Cout, Cin, k, k) [PyTorch Conv2d]; b: (Cout,)."""
    Cout, Cin, k, _ = w.shape
    C, N = x_c.shape[:2]
    assert C == Cin
    patches, Ho, Wo = _im2col_cnhw(x_c, k, stride, pad)
    out = gemm_bias_act(w.reshape(Cout, Cin * k * k), patches, b, act)
    return out.reshape(Cout, N, Ho, Wo)


# Sub-pixel tap selection for ConvTranspose2d(k=4, stride=2, padding=1):
# _SEL[parity, window_pos, kernel_tap] = 1 where the 3x3 input window position
# contributes with that kernel tap (derived from y = 2*i - 1 + kh).
_SEL = np.zeros((2, 3, 4), np.float32)
_SEL[0, 0, 3] = 1.0   # even output row: input row i-1 uses tap kh=3
_SEL[0, 1, 1] = 1.0   # even output row: input row i   uses tap kh=1
_SEL[1, 1, 2] = 1.0   # odd  output row: input row i   uses tap kh=2
_SEL[1, 2, 0] = 1.0   # odd  output row: input row i+1 uses tap kh=0


def conv_transpose2d_cnhw(x_c, w_t, b, act):
    """ConvTranspose2d(k=4, stride=2, padding=1) via sub-pixel decomposition.

    x_c: (Cin, N, H, W); w_t: (Cin, Cout, 4, 4) [PyTorch ConvTranspose2d]; b: (Cout,).
    One GEMM with K = Cin*9 and 4*Cout output rows, followed by a pixel shuffle.
    """
    Cin, Cout = w_t.shape[:2]
    C, N, H, W = x_c.shape
    assert C == Cin
    sel = jnp.asarray(_SEL)
    # (dy, dx, co, ci, wr, wc): 2x2-subpixel conv kernels over a 3x3 input window.
    w_sub = jnp.einsum("yrh,xcw,iohw->yxoirc", sel, sel, w_t)
    w_sub = w_sub.reshape(4 * Cout, Cin * 9)
    # 3x3 patches around each input pixel (zero-padded by 1 on each spatial side).
    xp = jnp.pad(x_c, ((0, 0), (0, 0), (1, 1), (1, 1)))
    cols = [xp[:, :, wr:wr + H, wc:wc + W] for wr in range(3) for wc in range(3)]
    patches = jnp.stack(cols, axis=1).reshape(Cin * 9, N * H * W)
    b_sub = jnp.tile(b, 4)
    out = gemm_bias_act(w_sub, patches, b_sub, act)          # (4*Cout, N*H*W)
    out = out.reshape(2, 2, Cout, N, H, W)
    out = out.transpose(2, 3, 4, 0, 5, 1).reshape(Cout, N, 2 * H, 2 * W)
    return out


# ---------------------------------------------------------------------------
# VAE parameters + forward
# ---------------------------------------------------------------------------
def init_params(key):
    def uinit(key, shape, fan_in, bias_size):
        scale = 1.0 / np.sqrt(fan_in)
        kw, kb = jax.random.split(key)
        w = jax.random.uniform(kw, shape, jnp.float32, -scale, scale)
        b = jax.random.uniform(kb, (bias_size,), jnp.float32, -scale, scale)
        return w, b

    keys = jax.random.split(key, 7)
    p = {}
    # Encoder Conv2d weights: (Cout, Cin, k, k).
    p["enc1_w"], p["enc1_b"] = uinit(keys[0], (12, 3, 4, 4), 3 * 16, 12)
    p["enc2_w"], p["enc2_b"] = uinit(keys[1], (24, 12, 4, 4), 12 * 16, 24)
    p["mu_w"], p["mu_b"] = uinit(keys[2], (48, 24, 4, 4), 24 * 16, 48)
    p["lv_w"], p["lv_b"] = uinit(keys[3], (48, 24, 4, 4), 24 * 16, 48)
    # Decoder ConvTranspose2d weights: (Cin, Cout, k, k); bias size = Cout.
    p["dec1_w"], p["dec1_b"] = uinit(keys[4], (48, 24, 4, 4), 24 * 16, 24)
    p["dec2_w"], p["dec2_b"] = uinit(keys[5], (24, 12, 4, 4), 12 * 16, 12)
    p["dec3_w"], p["dec3_b"] = uinit(keys[6], (12, 3, 4, 4), 3 * 16, 3)
    return p


def vae_forward(x, params, eps):
    """x: (N, 3, H, W) NCHW; eps: (N, 48, H//8, W//8) pre-sampled N(0,1)."""
    N = x.shape[0]
    x_c = x.transpose(1, 0, 2, 3)                   # CNHW internal layout
    # ----- encoder -----
    h = conv2d_cnhw(x_c, params["enc1_w"], params["enc1_b"], 2, 1, "relu")
    h = conv2d_cnhw(h, params["enc2_w"], params["enc2_b"], 2, 1, "relu")
    # ----- fused mu / logvar heads + reparametrization (one pallas_call) -----
    patches, Ho, Wo = _im2col_cnhw(h, 4, 2, 1)
    w_cat = jnp.concatenate([params["mu_w"].reshape(48, -1),
                             params["lv_w"].reshape(48, -1)], axis=0)
    b_cat = jnp.concatenate([params["mu_b"], params["lv_b"]])
    eps_flat = eps.transpose(1, 0, 2, 3).reshape(48, N * Ho * Wo)
    mu_f, lv_f, z_f = heads_reparam(w_cat, patches, b_cat, eps_flat)
    z = z_f.reshape(48, N, Ho, Wo)
    # ----- decoder -----
    d = conv_transpose2d_cnhw(z, params["dec1_w"], params["dec1_b"], "relu")
    d = conv_transpose2d_cnhw(d, params["dec2_w"], params["dec2_b"], "relu")
    recon = conv_transpose2d_cnhw(d, params["dec3_w"], params["dec3_b"], "tanh")
    # back to NCHW only at the model boundary
    recon = recon.transpose(1, 0, 2, 3)
    mu = mu_f.reshape(48, N, Ho, Wo).transpose(1, 0, 2, 3)
    logvar = lv_f.reshape(48, N, Ho, Wo).transpose(1, 0, 2, 3)
    return recon, mu, logvar


# ---------------------------------------------------------------------------
# Pure-JAX reference (for numerical validation of the Pallas path)
# ---------------------------------------------------------------------------
def ref_forward(x, params, eps):
    hp = jax.lax.Precision.HIGHEST

    def conv(x, w, b, s, p):
        y = jax.lax.conv_general_dilated(
            x, w, (s, s), [(p, p), (p, p)],
            dimension_numbers=("NCHW", "OIHW", "NCHW"), precision=hp)
        return y + b[None, :, None, None]

    def convT(x, w_t, b, s, p):
        k = w_t.shape[2]
        w = jnp.flip(w_t, (2, 3)).transpose(1, 0, 2, 3)
        y = jax.lax.conv_general_dilated(
            x, w, (1, 1), [(k - 1 - p,) * 2] * 2, lhs_dilation=(s, s),
            dimension_numbers=("NCHW", "OIHW", "NCHW"), precision=hp)
        return y + b[None, :, None, None]

    relu = jax.nn.relu
    h = relu(conv(x, params["enc1_w"], params["enc1_b"], 2, 1))
    h = relu(conv(h, params["enc2_w"], params["enc2_b"], 2, 1))
    mu = relu(conv(h, params["mu_w"], params["mu_b"], 2, 1))
    lv = relu(conv(h, params["lv_w"], params["lv_b"], 2, 1))
    z = eps * jnp.exp(0.5 * lv) + mu
    d = relu(convT(z, params["dec1_w"], params["dec1_b"], 2, 1))
    d = relu(convT(d, params["dec2_w"], params["dec2_b"], 2, 1))
    recon = jnp.tanh(convT(d, params["dec3_w"], params["dec3_b"], 2, 1))
    return recon, mu, lv


if __name__ == "__main__":
    key = jax.random.PRNGKey(0)
    k_x, k_p, k_eps = jax.random.split(key, 3)

    # Small input consistent with the module: NCHW, 3 input channels.
    B, C, H, W = 2, 3, 16, 16
    x = jax.random.normal(k_x, (B, C, H, W), jnp.float32)
    params = init_params(k_p)
    # Latent spatial size after 3 stride-2 convs: 16 -> 8 -> 4 -> 2, 48 channels.
    eps = jax.random.normal(k_eps, (B, 48, H // 8, W // 8), jnp.float32)

    recon, mu, logvar = jax.jit(vae_forward)(x, params, eps)
    jax.block_until_ready((recon, mu, logvar))

    assert recon.shape == (B, 3, H, W)
    assert mu.shape == (B, 48, H // 8, W // 8)
    assert logvar.shape == (B, 48, H // 8, W // 8)

    # Validate against the pure-JAX reference (bf16 MXU operands -> loose tolerance).
    r_ref, m_ref, l_ref = jax.jit(ref_forward)(x, params, eps)
    jax.block_until_ready((r_ref, m_ref, l_ref))
    for name, got, ref in (("recon", recon, r_ref), ("mu", mu, m_ref),
                           ("logvar", logvar, l_ref)):
        err = float(jnp.max(jnp.abs(got - ref)))
        assert err < 5e-2, f"{name} max abs err {err}"

    print("KERNEL_OK")
</pallas_src>

<mosaic_0001>
module attributes {stable_mosaic.version = 11 : i64} {
  func.func @_gemm_bias_act_kernel(%arg0: i32, %arg1: memref<12x48xbf16, #tpu.memory_space<vmem>>, %arg2: memref<48x128xbf16, #tpu.memory_space<vmem>>, %arg3: memref<12x1xf32, #tpu.memory_space<vmem>>, %arg4: memref<12x128xf32, #tpu.memory_space<vmem>>) attributes {dimension_semantics = [#tpu.dimension_semantics<arbitrary>], iteration_bounds = array<i64: 1>, scalar_prefetch = 0 : i64, scratch_operands = 0 : i64, tpu.core_type = #tpu.core_type<tc>, window_params = [{pipeline_mode = #tpu.pipeline_mode<synchronous>, transform_indices = @transform_0, window_bounds = array<i64: 12, 48>}, {pipeline_mode = #tpu.pipeline_mode<synchronous>, transform_indices = @transform_1, window_bounds = array<i64: 48, 128>}, {pipeline_mode = #tpu.pipeline_mode<synchronous>, transform_indices = @transform_2, window_bounds = array<i64: 12, 1>}, {pipeline_mode = #tpu.pipeline_mode<synchronous>, transform_indices = @transform_3, window_bounds = array<i64: 12, 128>}]} {
    %c0 = arith.constant 0 : index
    %c0_0 = arith.constant 0 : index
    %0 = vector.load %arg1[%c0, %c0_0] : memref<12x48xbf16, #tpu.memory_space<vmem>>, vector<12x48xbf16>
    %c0_1 = arith.constant 0 : index
    %c0_2 = arith.constant 0 : index
    %1 = vector.load %arg2[%c0_1, %c0_2] : memref<48x128xbf16, #tpu.memory_space<vmem>>, vector<48x128xbf16>
    %cst = arith.constant dense<0.000000e+00> : vector<12x128xf32>
    %2 = tpu.matmul %0, %1, %cst {dimension_numbers = #tpu.dot_dimension_numbers<[1], [0], [0], [1], [0, 0, 1, 1], [], []>} : vector<12x48xbf16>, vector<48x128xbf16>, vector<12x128xf32> -> vector<12x128xf32>
    %c0_3 = arith.constant 0 : index
    %c0_4 = arith.constant 0 : index
    %3 = vector.load %arg3[%c0_3, %c0_4] : memref<12x1xf32, #tpu.memory_space<vmem>>, vector<12x1xf32>
    %4 = vector.broadcast %3 : vector<12x1xf32> to vector<12x128xf32>
    %5 = arith.addf %2, %4 : vector<12x128xf32>
    %cst_5 = arith.constant 0.000000e+00 : f32
    %6 = vector.broadcast %cst_5 : f32 to vector<12x128xf32>
    %7 = arith.maximumf %5, %6 : vector<12x128xf32>
    %c0_6 = arith.constant 0 : index
    %c0_7 = arith.constant 0 : index
    %8 = vector.load %arg4[%c0_6, %c0_7] : memref<12x128xf32, #tpu.memory_space<vmem>>, vector<12x128xf32>
    tpu.vector_store %arg4[%c0_6, %c0_7], %7 {strides = array<i32>} : memref<12x128xf32, #tpu.memory_space<vmem>>, vector<12x128xf32>,
    return
  }
  func.func @transform_0(%arg0: i32) -> (i32, i32) {
    %c0_i32 = arith.constant 0 : i32
    %c0_i32_0 = arith.constant 0 : i32
    %c0_i32_1 = arith.constant 0 : i32
    return %c0_i32, %c0_i32_0 : i32, i32
  }
  func.func @transform_1(%arg0: i32) -> (i32, i32) {
    %c0_i32 = arith.constant 0 : i32
    %c0_i32_0 = arith.constant 0 : i32
    %c0_i32_1 = arith.constant 0 : i32
    return %c0_i32, %c0_i32_0 : i32, i32
  }
  func.func @transform_2(%arg0: i32) -> (i32, i32) {
    %c0_i32 = arith.constant 0 : i32
    %c0_i32_0 = arith.constant 0 : i32
    %c0_i32_1 = arith.constant 0 : i32
    return %c0_i32, %c0_i32_0 : i32, i32
  }
  func.func @transform_3(%arg0: i32) -> (i32, i32) {
    %c0_i32 = arith.constant 0 : i32
    %c0_i32_0 = arith.constant 0 : i32
    %c0_i32_1 = arith.constant 0 : i32
    return %c0_i32, %c0_i32_0 : i32, i32
  }
}

module attributes {stable_mosaic.version = 11 : i64} {
  func.func @_gemm_bias_act_kernel(%arg0: i32, %arg1: memref<24x192xbf16, #tpu.memory_space<vmem>>, %arg2: memref<192x32xbf16, #tpu.memory_space<vmem>>, %arg3: memref<24x1xf32, #tpu.memory_space<vmem>>, %arg4: memref<24x32xf32, #tpu.memory_space<vmem>>) attributes {dimension_semantics = [#tpu.dimension_semantics<arbitrary>], iteration_bounds = array<i64: 1>, scalar_prefetch = 0 : i64, scratch_operands = 0 : i64, tpu.core_type = #tpu.core_type<tc>, window_params = [{pipeline_mode = #tpu.pipeline_mode<synchronous>, transform_indices = @transform_0, window_bounds = array<i64: 24, 192>}, {pipeline_mode = #tpu.pipeline_mode<synchronous>, transform_indices = @transform_1, window_bounds = array<i64: 192, 32>}, {pipeline_mode = #tpu.pipeline_mode<synchronous>, transform_indices = @transform_2, window_bounds = array<i64: 24, 1>}, {pipeline_mode = #tpu.pipeline_mode<synchronous>, transform_indices = @transform_3, window_bounds = array<i64: 24, 32>}]} {
    %c0 = arith.constant 0 : index
    %c0_0 = arith.constant 0 : index
    %0 = vector.load %arg1[%c0, %c0_0] : memref<24x192xbf16, #tpu.memory_space<vmem>>, vector<24x192xbf16>
    %c0_1 = arith.constant 0 : index
    %c0_2 = arith.constant 0 : index
    %1 = vector.load %arg2[%c0_1, %c0_2] : memref<192x32xbf16, #tpu.memory_space<vmem>>, vector<192x32xbf16>
    %cst = arith.constant dense<0.000000e+00> : vector<24x32xf32>
    %2 = tpu.matmul %0, %1, %cst {dimension_numbers = #tpu.dot_dimension_numbers<[1], [0], [0], [1], [0, 0, 1, 1], [], []>} : vector<24x192xbf16>, vector<192x32xbf16>, vector<24x32xf32> -> vector<24x32xf32>
    %c0_3 = arith.constant 0 : index
    %c0_4 = arith.constant 0 : index
    %3 = vector.load %arg3[%c0_3, %c0_4] : memref<24x1xf32, #tpu.memory_space<vmem>>, vector<24x1xf32>
    %4 = vector.broadcast %3 : vector<24x1xf32> to vector<24x32xf32>
    %5 = arith.addf %2, %4 : vector<24x32xf32>
    %cst_5 = arith.constant 0.000000e+00 : f32
    %6 = vector.broadcast %cst_5 : f32 to vector<24x32xf32>
    %7 = arith.maximumf %5, %6 : vector<24x32xf32>
    %c0_6 = arith.constant 0 : index
    %c0_7 = arith.constant 0 : index
    %8 = vector.load %arg4[%c0_6, %c0_7] : memref<24x32xf32, #tpu.memory_space<vmem>>, vector<24x32xf32>
    tpu.vector_store %arg4[%c0_6, %c0_7], %7 {strides = array<i32>} : memref<24x32xf32, #tpu.memory_space<vmem>>, vector<24x32xf32>,
    return
  }
  func.func @transform_0(%arg0: i32) -> (i32, i32) {
    %c0_i32 = arith.constant 0 : i32
    %c0_i32_0 = arith.constant 0 : i32
    %c0_i32_1 = arith.constant 0 : i32
    return %c0_i32, %c0_i32_0 : i32, i32
  }
  func.func @transform_1(%arg0: i32) -> (i32, i32) {
    %c0_i32 = arith.constant 0 : i32
    %c0_i32_0 = arith.constant 0 : i32
    %c0_i32_1 = arith.constant 0 : i32
    return %c0_i32, %c0_i32_0 : i32, i32
  }
  func.func @transform_2(%arg0: i32) -> (i32, i32) {
    %c0_i32 = arith.constant 0 : i32
    %c0_i32_0 = arith.constant 0 : i32
    %c0_i32_1 = arith.constant 0 : i32
    return %c0_i32, %c0_i32_0 : i32, i32
  }
  func.func @transform_3(%arg0: i32) -> (i32, i32) {
    %c0_i32 = arith.constant 0 : i32
    %c0_i32_0 = arith.constant 0 : i32
    %c0_i32_1 = arith.constant 0 : i32
    return %c0_i32, %c0_i32_0 : i32, i32
  }
}

module attributes {stable_mosaic.version = 11 : i64} {
  func.func @_heads_reparam_kernel(%arg0: i32, %arg1: memref<96x384xbf16, #tpu.memory_space<vmem>>, %arg2: memref<384x8xbf16, #tpu.memory_space<vmem>>, %arg3: memref<96x1xf32, #tpu.memory_space<vmem>>, %arg4: memref<48x8xf32, #tpu.memory_space<vmem>>, %arg5: memref<48x8xf32, #tpu.memory_space<vmem>>, %arg6: memref<48x8xf32, #tpu.memory_space<vmem>>, %arg7: memref<48x8xf32, #tpu.memory_space<vmem>>) attributes {dimension_semantics = [#tpu.dimension_semantics<arbitrary>], iteration_bounds = array<i64: 1>, scalar_prefetch = 0 : i64, scratch_operands = 0 : i64, tpu.core_type = #tpu.core_type<tc>, window_params = [{pipeline_mode = #tpu.pipeline_mode<synchronous>, transform_indices = @transform_0, window_bounds = array<i64: 96, 384>}, {pipeline_mode = #tpu.pipeline_mode<synchronous>, transform_indices = @transform_1, window_bounds = array<i64: 384, 8>}, {pipeline_mode = #tpu.pipeline_mode<synchronous>, transform_indices = @transform_2, window_bounds = array<i64: 96, 1>}, {pipeline_mode = #tpu.pipeline_mode<synchronous>, transform_indices = @transform_3, window_bounds = array<i64: 48, 8>}, {pipeline_mode = #tpu.pipeline_mode<synchronous>, transform_indices = @transform_4, window_bounds = array<i64: 48, 8>}, {pipeline_mode = #tpu.pipeline_mode<synchronous>, transform_indices = @transform_5, window_bounds = array<i64: 48, 8>}, {pipeline_mode = #tpu.pipeline_mode<synchronous>, transform_indices = @transform_6, window_bounds = array<i64: 48, 8>}]} {
    %c0 = arith.constant 0 : index
    %c0_0 = arith.constant 0 : index
    %0 = vector.load %arg1[%c0, %c0_0] : memref<96x384xbf16, #tpu.memory_space<vmem>>, vector<96x384xbf16>
    %c0_1 = arith.constant 0 : index
    %c0_2 = arith.constant 0 : index
    %1 = vector.load %arg2[%c0_1, %c0_2] : memref<384x8xbf16, #tpu.memory_space<vmem>>, vector<384x8xbf16>
    %cst = arith.constant dense<0.000000e+00> : vector<96x8xf32>
    %2 = tpu.matmul %0, %1, %cst {dimension_numbers = #tpu.dot_dimension_numbers<[1], [0], [0], [1], [0, 0, 1, 1], [], []>} : vector<96x384xbf16>, vector<384x8xbf16>, vector<96x8xf32> -> vector<96x8xf32>
    %c0_3 = arith.constant 0 : index
    %c0_4 = arith.constant 0 : index
    %3 = vector.load %arg3[%c0_3, %c0_4] : memref<96x1xf32, #tpu.memory_space<vmem>>, vector<96x1xf32>
    %4 = vector.broadcast %3 : vector<96x1xf32> to vector<96x8xf32>
    %5 = arith.addf %2, %4 : vector<96x8xf32>
    %cst_5 = arith.constant 0.000000e+00 : f32
    %6 = vector.broadcast %cst_5 : f32 to vector<96x8xf32>
    %7 = arith.maximumf %5, %6 : vector<96x8xf32>
    %8 = vector.extract_strided_slice %7 {offsets = [0, 0], sizes = [48, 8], strides = [1, 1]} : vector<96x8xf32> to vector<48x8xf32>
    %9 = vector.extract_strided_slice %7 {offsets = [48, 0], sizes = [48, 8], strides = [1, 1]} : vector<96x8xf32> to vector<48x8xf32>
    %c0_6 = arith.constant 0 : index
    %c0_7 = arith.constant 0 : index
    %10 = vector.load %arg5[%c0_6, %c0_7] : memref<48x8xf32, #tpu.memory_space<vmem>>, vector<48x8xf32>
    tpu.vector_store %arg5[%c0_6, %c0_7], %8 {strides = array<i32>} : memref<48x8xf32, #tpu.memory_space<vmem>>, vector<48x8xf32>,
    %c0_8 = arith.constant 0 : index
    %c0_9 = arith.constant 0 : index
    %11 = vector.load %arg6[%c0_8, %c0_9] : memref<48x8xf32, #tpu.memory_space<vmem>>, vector<48x8xf32>
    tpu.vector_store %arg6[%c0_8, %c0_9], %9 {strides = array<i32>} : memref<48x8xf32, #tpu.memory_space<vmem>>, vector<48x8xf32>,
    %c0_10 = arith.constant 0 : index
    %c0_11 = arith.constant 0 : index
    %12 = vector.load %arg4[%c0_10, %c0_11] : memref<48x8xf32, #tpu.memory_space<vmem>>, vector<48x8xf32>
    %cst_12 = arith.constant 5.000000e-01 : f32
    %13 = vector.broadcast %cst_12 : f32 to vector<48x8xf32>
    %14 = arith.mulf %9, %13 : vector<48x8xf32>
    %15 = math.exp %14 : vector<48x8xf32>
    %16 = arith.mulf %12, %15 : vector<48x8xf32>
    %17 = arith.addf %16, %8 : vector<48x8xf32>
    %c0_13 = arith.constant 0 : index
    %c0_14 = arith.constant 0 : index
    %18 = vector.load %arg7[%c0_13, %c0_14] : memref<48x8xf32, #tpu.memory_space<vmem>>, vector<48x8xf32>
    tpu.vector_store %arg7[%c0_13, %c0_14], %17 {strides = array<i32>} : memref<48x8xf32, #tpu.memory_space<vmem>>, vector<48x8xf32>,
    return
  }
  func.func @transform_0(%arg0: i32) -> (i32, i32) {
    %c0_i32 = arith.constant 0 : i32
    %c0_i32_0 = arith.constant 0 : i32
    %c0_i32_1 = arith.constant 0 : i32
    return %c0_i32, %c0_i32_0 : i32, i32
  }
  func.func @transform_1(%arg0: i32) -> (i32, i32) {
    %c0_i32 = arith.constant 0 : i32
    %c0_i32_0 = arith.constant 0 : i32
    %c0_i32_1 = arith.constant 0 : i32
    return %c0_i32, %c0_i32_0 : i32, i32
  }
  func.func @transform_2(%arg0: i32) -> (i32, i32) {
    %c0_i32 = arith.constant 0 : i32
    %c0_i32_0 = arith.constant 0 : i32
    %c0_i32_1 = arith.constant 0 : i32
    return %c0_i32, %c0_i32_0 : i32, i32
  }
  func.func @transform_3(%arg0: i32) -> (i32, i32) {
    %c0_i32 = arith.constant 0 : i32
    %c0_i32_0 = arith.constant 0 : i32
    %c0_i32_1 = arith.constant 0 : i32
    return %c0_i32, %c0_i32_0 : i32, i32
  }
  func.func @transform_4(%arg0: i32) -> (i32, i32) {
    %c0_i32 = arith.constant 0 : i32
    %c0_i32_0 = arith.constant 0 : i32
    %c0_i32_1 = arith.constant 0 : i32
    return %c0_i32, %c0_i32_0 : i32, i32
  }
  func.func @transform_5(%arg0: i32) -> (i32, i32) {
    %c0_i32 = arith.constant 0 : i32
    %c0_i32_0 = arith.constant 0 : i32
    %c0_i32_1 = arith.constant 0 : i32
    return %c0_i32, %c0_i32_0 : i32, i32
  }
  func.func @transform_6(%arg0: i32) -> (i32, i32) {
    %c0_i32 = arith.constant 0 : i32
    %c0_i32_0 = arith.constant 0 : i32
    %c0_i32_1 = arith.constant 0 : i32
    return %c0_i32, %c0_i32_0 : i32, i32
  }
}

module attributes {stable_mosaic.version = 11 : i64} {
  func.func @_gemm_bias_act_kernel(%arg0: i32, %arg1: memref<96x432xbf16, #tpu.memory_space<vmem>>, %arg2: memref<432x8xbf16, #tpu.memory_space<vmem>>, %arg3: memref<96x1xf32, #tpu.memory_space<vmem>>, %arg4: memref<96x8xf32, #tpu.memory_space<vmem>>) attributes {dimension_semantics = [#tpu.dimension_semantics<arbitrary>], iteration_bounds = array<i64: 1>, scalar_prefetch = 0 : i64, scratch_operands = 0 : i64, tpu.core_type = #tpu.core_type<tc>, window_params = [{pipeline_mode = #tpu.pipeline_mode<synchronous>, transform_indices = @transform_0, window_bounds = array<i64: 96, 432>}, {pipeline_mode = #tpu.pipeline_mode<synchronous>, transform_indices = @transform_1, window_bounds = array<i64: 432, 8>}, {pipeline_mode = #tpu.pipeline_mode<synchronous>, transform_indices = @transform_2, window_bounds = array<i64: 96, 1>}, {pipeline_mode = #tpu.pipeline_mode<synchronous>, transform_indices = @transform_3, window_bounds = array<i64: 96, 8>}]} {
    %c0 = arith.constant 0 : index
    %c0_0 = arith.constant 0 : index
    %0 = vector.load %arg1[%c0, %c0_0] : memref<96x432xbf16, #tpu.memory_space<vmem>>, vector<96x432xbf16>
    %c0_1 = arith.constant 0 : index
    %c0_2 = arith.constant 0 : index
    %1 = vector.load %arg2[%c0_1, %c0_2] : memref<432x8xbf16, #tpu.memory_space<vmem>>, vector<432x8xbf16>
    %cst = arith.constant dense<0.000000e+00> : vector<96x8xf32>
    %2 = tpu.matmul %0, %1, %cst {dimension_numbers = #tpu.dot_dimension_numbers<[1], [0], [0], [1], [0, 0, 1, 1], [], []>} : vector<96x432xbf16>, vector<432x8xbf16>, vector<96x8xf32> -> vector<96x8xf32>
    %c0_3 = arith.constant 0 : index
    %c0_4 = arith.constant 0 : index
    %3 = vector.load %arg3[%c0_3, %c0_4] : memref<96x1xf32, #tpu.memory_space<vmem>>, vector<96x1xf32>
    %4 = vector.broadcast %3 : vector<96x1xf32> to vector<96x8xf32>
    %5 = arith.addf %2, %4 : vector<96x8xf32>
    %cst_5 = arith.constant 0.000000e+00 : f32
    %6 = vector.broadcast %cst_5 : f32 to vector<96x8xf32>
    %7 = arith.maximumf %5, %6 : vector<96x8xf32>
    %c0_6 = arith.constant 0 : index
    %c0_7 = arith.constant 0 : index
    %8 = vector.load %arg4[%c0_6, %c0_7] : memref<96x8xf32, #tpu.memory_space<vmem>>, vector<96x8xf32>
    tpu.vector_store %arg4[%c0_6, %c0_7], %7 {strides = array<i32>} : memref<96x8xf32, #tpu.memory_space<vmem>>, vector<96x8xf32>,
    return
  }
  func.func @transform_0(%arg0: i32) -> (i32, i32) {
    %c0_i32 = arith.constant 0 : i32
    %c0_i32_0 = arith.constant 0 : i32
    %c0_i32_1 = arith.constant 0 : i32
    return %c0_i32, %c0_i32_0 : i32, i32
  }
  func.func @transform_1(%arg0: i32) -> (i32, i32) {
    %c0_i32 = arith.constant 0 : i32
    %c0_i32_0 = arith.constant 0 : i32
    %c0_i32_1 = arith.constant 0 : i32
    return %c0_i32, %c0_i32_0 : i32, i32
  }
  func.func @transform_2(%arg0: i32) -> (i32, i32) {
    %c0_i32 = arith.constant 0 : i32
    %c0_i32_0 = arith.constant 0 : i32
    %c0_i32_1 = arith.constant 0 : i32
    return %c0_i32, %c0_i32_0 : i32, i32
  }
  func.func @transform_3(%arg0: i32) -> (i32, i32) {
    %c0_i32 = arith.constant 0 : i32
    %c0_i32_0 = arith.constant 0 : i32
    %c0_i32_1 = arith.constant 0 : i32
    return %c0_i32, %c0_i32_0 : i32, i32
  }
}

module attributes {stable_mosaic.version = 11 : i64} {
  func.func @_gemm_bias_act_kernel(%arg0: i32, %arg1: memref<48x216xbf16, #tpu.memory_space<vmem>>, %arg2: memref<216x32xbf16, #tpu.memory_space<vmem>>, %arg3: memref<48x1xf32, #tpu.memory_space<vmem>>, %arg4: memref<48x32xf32, #tpu.memory_space<vmem>>) attributes {dimension_semantics = [#tpu.dimension_semantics<arbitrary>], iteration_bounds = array<i64: 1>, scalar_prefetch = 0 : i64, scratch_operands = 0 : i64, tpu.core_type = #tpu.core_type<tc>, window_params = [{pipeline_mode = #tpu.pipeline_mode<synchronous>, transform_indices = @transform_0, window_bounds = array<i64: 48, 216>}, {pipeline_mode = #tpu.pipeline_mode<synchronous>, transform_indices = @transform_1, window_bounds = array<i64: 216, 32>}, {pipeline_mode = #tpu.pipeline_mode<synchronous>, transform_indices = @transform_2, window_bounds = array<i64: 48, 1>}, {pipeline_mode = #tpu.pipeline_mode<synchronous>, transform_indices = @transform_3, window_bounds = array<i64: 48, 32>}]} {
    %c0 = arith.constant 0 : index
    %c0_0 = arith.constant 0 : index
    %0 = vector.load %arg1[%c0, %c0_0] : memref<48x216xbf16, #tpu.memory_space<vmem>>, vector<48x216xbf16>
    %c0_1 = arith.constant 0 : index
    %c0_2 = arith.constant 0 : index
    %1 = vector.load %arg2[%c0_1, %c0_2] : memref<216x32xbf16, #tpu.memory_space<vmem>>, vector<216x32xbf16>
    %cst = arith.constant dense<0.000000e+00> : vector<48x32xf32>
    %2 = tpu.matmul %0, %1, %cst {dimension_numbers = #tpu.dot_dimension_numbers<[1], [0], [0], [1], [0, 0, 1, 1], [], []>} : vector<48x216xbf16>, vector<216x32xbf16>, vector<48x32xf32> -> vector<48x32xf32>
    %c0_3 = arith.constant 0 : index
    %c0_4 = arith.constant 0 : index
    %3 = vector.load %arg3[%c0_3, %c0_4] : memref<48x1xf32, #tpu.memory_space<vmem>>, vector<48x1xf32>
    %4 = vector.broadcast %3 : vector<48x1xf32> to vector<48x32xf32>
    %5 = arith.addf %2, %4 : vector<48x32xf32>
    %cst_5 = arith.constant 0.000000e+00 : f32
    %6 = vector.broadcast %cst_5 : f32 to vector<48x32xf32>
    %7 = arith.maximumf %5, %6 : vector<48x32xf32>
    %c0_6 = arith.constant 0 : index
    %c0_7 = arith.constant 0 : index
    %8 = vector.load %arg4[%c0_6, %c0_7] : memref<48x32xf32, #tpu.memory_space<vmem>>, vector<48x32xf32>
    tpu.vector_store %arg4[%c0_6, %c0_7], %7 {strides = array<i32>} : memref<48x32xf32, #tpu.memory_space<vmem>>, vector<48x32xf32>,
    return
  }
  func.func @transform_0(%arg0: i32) -> (i32, i32) {
    %c0_i32 = arith.constant 0 : i32
    %c0_i32_0 = arith.constant 0 : i32
    %c0_i32_1 = arith.constant 0 : i32
    return %c0_i32, %c0_i32_0 : i32, i32
  }
  func.func @transform_1(%arg0: i32) -> (i32, i32) {
    %c0_i32 = arith.constant 0 : i32
    %c0_i32_0 = arith.constant 0 : i32
    %c0_i32_1 = arith.constant 0 : i32
    return %c0_i32, %c0_i32_0 : i32, i32
  }
  func.func @transform_2(%arg0: i32) -> (i32, i32) {
    %c0_i32 = arith.constant 0 : i32
    %c0_i32_0 = arith.constant 0 : i32
    %c0_i32_1 = arith.constant 0 : i32
    return %c0_i32, %c0_i32_0 : i32, i32
  }
  func.func @transform_3(%arg0: i32) -> (i32, i32) {
    %c0_i32 = arith.constant 0 : i32
    %c0_i32_0 = arith.constant 0 : i32
    %c0_i32_1 = arith.constant 0 : i32
    return %c0_i32, %c0_i32_0 : i32, i32
  }
}

module attributes {stable_mosaic.version = 11 : i64} {
  func.func @_gemm_bias_act_kernel(%arg0: i32, %arg1: memref<12x108xbf16, #tpu.memory_space<vmem>>, %arg2: memref<108x128xbf16, #tpu.memory_space<vmem>>, %arg3: memref<12x1xf32, #tpu.memory_space<vmem>>, %arg4: memref<12x128xf32, #tpu.memory_space<vmem>>) attributes {dimension_semantics = [#tpu.dimension_semantics<arbitrary>], iteration_bounds = array<i64: 1>, scalar_prefetch = 0 : i64, scratch_operands = 0 : i64, tpu.core_type = #tpu.core_type<tc>, window_params = [{pipeline_mode = #tpu.pipeline_mode<synchronous>, transform_indices = @transform_0, window_bounds = array<i64: 12, 108>}, {pipeline_mode = #tpu.pipeline_mode<synchronous>, transform_indices = @transform_1, window_bounds = array<i64: 108, 128>}, {pipeline_mode = #tpu.pipeline_mode<synchronous>, transform_indices = @transform_2, window_bounds = array<i64: 12, 1>}, {pipeline_mode = #tpu.pipeline_mode<synchronous>, transform_indices = @transform_3, window_bounds = array<i64: 12, 128>}]} {
    %c0 = arith.constant 0 : index
    %c0_0 = arith.constant 0 : index
    %0 = vector.load %arg1[%c0, %c0_0] : memref<12x108xbf16, #tpu.memory_space<vmem>>, vector<12x108xbf16>
    %c0_1 = arith.constant 0 : index
    %c0_2 = arith.constant 0 : index
    %1 = vector.load %arg2[%c0_1, %c0_2] : memref<108x128xbf16, #tpu.memory_space<vmem>>, vector<108x128xbf16>
    %cst = arith.constant dense<0.000000e+00> : vector<12x128xf32>
    %2 = tpu.matmul %0, %1, %cst {dimension_numbers = #tpu.dot_dimension_numbers<[1], [0], [0], [1], [0, 0, 1, 1], [], []>} : vector<12x108xbf16>, vector<108x128xbf16>, vector<12x128xf32> -> vector<12x128xf32>
    %c0_3 = arith.constant 0 : index
    %c0_4 = arith.constant 0 : index
    %3 = vector.load %arg3[%c0_3, %c0_4] : memref<12x1xf32, #tpu.memory_space<vmem>>, vector<12x1xf32>
    %4 = vector.broadcast %3 : vector<12x1xf32> to vector<12x128xf32>
    %5 = arith.addf %2, %4 : vector<12x128xf32>
    %6 = math.tanh %5 : vector<12x128xf32>
    %c0_5 = arith.constant 0 : index
    %c0_6 = arith.constant 0 : index
    %7 = vector.load %arg4[%c0_5, %c0_6] : memref<12x128xf32, #tpu.memory_space<vmem>>, vector<12x128xf32>
    tpu.vector_store %arg4[%c0_5, %c0_6], %6 {strides = array<i32>} : memref<12x128xf32, #tpu.memory_space<vmem>>, vector<12x128xf32>,
    return
  }
  func.func @transform_0(%arg0: i32) -> (i32, i32) {
    %c0_i32 = arith.constant 0 : i32
    %c0_i32_0 = arith.constant 0 : i32
    %c0_i32_1 = arith.constant 0 : i32
    return %c0_i32, %c0_i32_0 : i32, i32
  }
  func.func @transform_1(%arg0: i32) -> (i32, i32) {
    %c0_i32 = arith.constant 0 : i32
    %c0_i32_0 = arith.constant 0 : i32
    %c0_i32_1 = arith.constant 0 : i32
    return %c0_i32, %c0_i32_0 : i32, i32
  }
  func.func @transform_2(%arg0: i32) -> (i32, i32) {
    %c0_i32 = arith.constant 0 : i32
    %c0_i32_0 = arith.constant 0 : i32
    %c0_i32_1 = arith.constant 0 : i32
    return %c0_i32, %c0_i32_0 : i32, i32
  }
  func.func @transform_3(%arg0: i32) -> (i32, i32) {
    %c0_i32 = arith.constant 0 : i32
    %c0_i32_0 = arith.constant 0 : i32
    %c0_i32_1 = arith.constant 0 : i32
    return %c0_i32, %c0_i32_0 : i32, i32
  }
}

</mosaic_0001>

<llo_original>
// kernel: vae_forward.6
$region0: #{vae_forward.6}
  #allocation0 [shape = 'u32[]', space=smem, size = 0x4, offset = 0x4, fixed_abs, tag = 'smem constant byte address 0x4 - core index']
  #allocation1 [shape = 'u32[144,128]{1,0:T(1,128)}', space=vmem, size = 0x12000, scoped, tag = 'internal scratch']
  %s0 = inlined_call_operand.vmem [shape: bf16[12,48], index: 0, kind: input, shape index: {}]
  %s1 = inlined_call_operand.vmem [shape: bf16[48,128], index: 1, kind: input, shape index: {}]
  %s2 = inlined_call_operand.vmem [shape: f32[12,1], index: 2, kind: input, shape index: {}]
  %s3 = inlined_call_operand.vmem [shape: f32[12,128], index: 3, kind: output, shape index: {}]
  %s4 = sld [smem:[#allocation0]]
  $region22: #{vae_forward.6} parent=0
    _
  %s6 = ssub.s32 1, %s4
  %s7 = scalar_select 0, %s6, %s4
  // Predicated region
  $region2: #{vae_forward.6} parent=0 // pred_check
    _
  $region3: #{vae_forward.6} parent=0 // pred_check_branch
    %9 = sbr.rel (0) target = $region5
  $region4: #{vae_forward.6} parent=0 // pred_region
    _
  $region5: #{vae_forward.6} parent=0 // pred_fallthru
    _
  // Predicated region
  $region6: #{vae_forward.6} parent=0 // pred_check
    _
  $region7: #{vae_forward.6} parent=0 // pred_check_branch
    %11 = sbr.rel (0) target = $region9
  $region8: #{vae_forward.6} parent=0 // pred_region
    _
  $region9: #{vae_forward.6} parent=0 // pred_fallthru
    _
  // Predicated region
  $region10: #{vae_forward.6} parent=0 // pred_check
    _
  $region11: #{vae_forward.6} parent=0 // pred_check_branch
    %13 = sbr.rel (0) target = $region13
  $region12: #{vae_forward.6} parent=0 // pred_region
    _
  $region13: #{vae_forward.6} parent=0 // pred_fallthru
    _
  %v15 = vld [vmem:[%s0] sm:$0xf]
  %v16 = vld [vmem:[%s0 + $0x4] sm:$0x3]
  %v17 = vld [vmem:[%s1] sm:$0xf]
  %v18 = vld [vmem:[%s1 + $0x4] sm:$0xf]
  %v19 = vld [vmem:[%s1 + $0x8] sm:$0xf]
  %v20 = vld [vmem:[%s1 + $0xc] sm:$0xf]
  %v21 = vld [vmem:[%s1 + $0x10] sm:$0xf]
  %v22 = vld [vmem:[%s1 + $0x14] sm:$0xf]
  %v23 = vld [vmem:[%s2] sm:$0xff]
  %v24 = vld [vmem:[%s2 + $0x8] sm:$0xf]
  %26 = vset.pattern.permute.xlu0 0
  %27 = vperm.xlu0 %26, %v23
  %v28 = vpop.permute.xlu0 %27
  %31 = vset.pattern.permute.xlu0 0
  %32 = vperm.xlu0 %31, %v24
  %v33 = vpop.permute.xlu0 %32
  %v37 = vunpack.c.l.b16 %v15
  %v38 = vunpack.c.l.b16 %v16
  %v39 = vpack.c.b16 %v38, %v37
  %v46 = vunpack.c.l.b16 %v17
  %v47 = vunpack.c.l.b16 %v18
  %v48 = vunpack.c.l.b16 %v19
  %v49 = vunpack.c.l.b16 %v20
  %v50 = vunpack.c.l.b16 %v21
  %v51 = vunpack.c.l.b16 %v22
  %v52 = vpack.c.b16 %v47, %v46
  %v53 = vpack.c.b16 %v49, %v48
  %v54 = vpack.c.b16 %v51, %v50
  %vm58 = vcmask 392192
  %v60 = vsel %vm58, %v39, 0
  %62 = vmatprep.subr.bf16.mxu0 0
  %63 = vmatpush1.bf16.msra.mxu0 %v52
  %64 = vmatprep.subr.bf16.mxu0 0
  %65 = vmatpush1.bf16.msra.mxu0 %v53
  %66 = vmatprep.subr.bf16.mxu0 0
  %67 = vmatpush1.bf16.msra.mxu0 %v54
  %68 = vmatprep.subr.bf16.mxu0 0
  %69 = vmatpush1.bf16.msra.mxu0 0
  %70 = vmatprep.subr.bf16.mxu0 0
  %71 = vmatpush1.bf16.msra.mxu0 0
  %72 = vmatprep.subr.bf16.mxu0 0
  %73 = vmatpush1.bf16.msra.mxu0 0
  %74 = vmatprep.subr.bf16.mxu0 0
  %75 = vmatpush1.bf16.msra.mxu0 0
  %76 = vmatprep.subr.bf16.mxu0 0
  %77 = vmatpush1.bf16.msra.mxu0 0
  %78 = vmatprep.subr.bf16.mxu0 0
  %79 = vmatpush1.bf16.msra.mxu0 0
  %80 = vmatprep.subr.bf16.mxu0 0
  %81 = vmatpush1.bf16.msra.mxu0 0
  %82 = vmatprep.subr.bf16.mxu0 0
  %83 = vmatpush1.bf16.msra.mxu0 0
  %84 = vmatprep.subr.bf16.mxu0 0
  %85 = vmatpush1.bf16.msra.mxu0 0
  %86 = vmatprep.subr.bf16.mxu0 0
  %87 = vmatpush1.bf16.msra.mxu0 0
  %88 = vmatprep.subr.bf16.mxu0 0
  %89 = vmatpush1.bf16.msra.mxu0 0
  %90 = vmatprep.subr.bf16.mxu0 0
  %91 = vmatpush1.bf16.msra.mxu0 0
  %92 = vmatprep.subr.bf16.mxu0 0
  %93 = vmatpush1.bf16.msra.mxu0 0
  %94 = vmatprep.mubr.bf16.mxu0 0
  %95 = vmatmul.mubr.bf16.gmra.mrb[0].mxu0 %v60
  %v96 = vpop.f32.mrb[0].mxu0
  %v97 = vadd.f32 %v28, %v96
  %v98 = vpop.f32.mrb[0].mxu0
  %v99 = vpop.f32.mrb[0].mxu0
  %v100 = vadd.f32 %v33, %v99
  %v101 = vpop.f32.mrb[0].mxu0
  %102 = vdwg.mxu0
  %v103 = vmax.f32 %v97, 0.0
  %v104 = vmax.f32 %v100, 0.0
  %105 = vst [vmem:[%s3] sm:$0xff] %v103
  %106 = vst [vmem:[%s3 + $0x8] sm:$0xf] %v104
  // Predicated region
  $region14: #{vae_forward.6} parent=0 // pred_check
    _
  $region15: #{vae_forward.6} parent=0 // pred_check_branch
    %108 = sbr.rel (0) target = $region17
  $region16: #{vae_forward.6} parent=0 // pred_region
    _
  $region17: #{vae_forward.6} parent=0 // pred_fallthru
    _
  // Predicated region
  $region18: #{vae_forward.6} parent=0 // pred_check
    _
  $region19: #{vae_forward.6} parent=0 // pred_check_branch
    %110 = sbr.rel (0) target = $region21
  $region20: #{vae_forward.6} parent=0 // pred_region
    _
  $region21: #{vae_forward.6} parent=0 // pred_fallthru
    _

// kernel: vae_forward.7
$region0: #{vae_forward.7}
  #allocation0 [shape = 'u32[]', space=smem, size = 0x4, offset = 0x4, fixed_abs, tag = 'smem constant byte address 0x4 - core index']
  #allocation1 [shape = 'u32[144,128]{1,0:T(1,128)}', space=vmem, size = 0x12000, scoped, tag = 'internal scratch']
  %s0 = inlined_call_operand.vmem [shape: bf16[24,192], index: 0, kind: input, shape index: {}]
  %s1 = inlined_call_operand.vmem [shape: bf16[192,32], index: 1, kind: input, shape index: {}]
  %s2 = inlined_call_operand.vmem [shape: f32[24,1], index: 2, kind: input, shape index: {}]
  %s3 = inlined_call_operand.vmem [shape: f32[24,32], index: 3, kind: output, shape index: {}]
  %s4 = sld [smem:[#allocation0]]
  $region22: #{vae_forward.7} parent=0
    _
  %s6 = ssub.s32 1, %s4
  %s7 = scalar_select 0, %s6, %s4
  // Predicated region
  $region2: #{vae_forward.7} parent=0 // pred_check
    _
  $region3: #{vae_forward.7} parent=0 // pred_check_branch
    %9 = sbr.rel (0) target = $region5
  $region4: #{vae_forward.7} parent=0 // pred_region
    _
  $region5: #{vae_forward.7} parent=0 // pred_fallthru
    _
  // Predicated region
  $region6: #{vae_forward.7} parent=0 // pred_check
    _
  $region7: #{vae_forward.7} parent=0 // pred_check_branch
    %11 = sbr.rel (0) target = $region9
  $region8: #{vae_forward.7} parent=0 // pred_region
    _
  $region9: #{vae_forward.7} parent=0 // pred_fallthru
    _
  // Predicated region
  $region10: #{vae_forward.7} parent=0 // pred_check
    _
  $region11: #{vae_forward.7} parent=0 // pred_check_branch
    %13 = sbr.rel (0) target = $region13
  $region12: #{vae_forward.7} parent=0 // pred_region
    _
  $region13: #{vae_forward.7} parent=0 // pred_fallthru
    _
  %v15 = vld [vmem:[%s0] sm:$0xff]
  %v16 = vld [vmem:[%s0 + $0x8] sm:$0xff]
  %v17 = vld [vmem:[%s0 + $0x10] sm:$0xff]
  %v18 = vld [vmem:[%s1] sm:$0xf]
  %v19 = vld [vmem:[%s1 + $0x4] sm:$0xf]
  %v20 = vld [vmem:[%s1 + $0x8] sm:$0xf]
  %v21 = vld [vmem:[%s1 + $0xc] sm:$0xf]
  %v22 = vld [vmem:[%s1 + $0x10] sm:$0xf]
  %v23 = vld [vmem:[%s1 + $0x14] sm:$0xf]
  %v24 = vld [vmem:[%s1 + $0x18] sm:$0xf]
  %v25 = vld [vmem:[%s1 + $0x1c] sm:$0xf]
  %v26 = vld [vmem:[%s1 + $0x20] sm:$0xf]
  %v27 = vld [vmem:[%s1 + $0x24] sm:$0xf]
  %v28 = vld [vmem:[%s1 + $0x28] sm:$0xf]
  %v29 = vld [vmem:[%s1 + $0x2c] sm:$0xf]
  %v30 = vld [vmem:[%s1 + $0x30] sm:$0xf]
  %v31 = vld [vmem:[%s1 + $0x34] sm:$0xf]
  %v32 = vld [vmem:[%s1 + $0x38] sm:$0xf]
  %v33 = vld [vmem:[%s1 + $0x3c] sm:$0xf]
  %v34 = vld [vmem:[%s1 + $0x40] sm:$0xf]
  %v35 = vld [vmem:[%s1 + $0x44] sm:$0xf]
  %v36 = vld [vmem:[%s1 + $0x48] sm:$0xf]
  %v37 = vld [vmem:[%s1 + $0x4c] sm:$0xf]
  %v38 = vld [vmem:[%s1 + $0x50] sm:$0xf]
  %v39 = vld [vmem:[%s1 + $0x54] sm:$0xf]
  %v40 = vld [vmem:[%s1 + $0x58] sm:$0xf]
  %v41 = vld [vmem:[%s1 + $0x5c] sm:$0xf]
  %v42 = vld [vmem:[%s2] sm:$0xff]
  %v43 = vld [vmem:[%s2 + $0x8] sm:$0xff]
  %v44 = vld [vmem:[%s2 + $0x10] sm:$0xff]
  %46 = vset.pattern.permute.xlu0 0
  %47 = vperm.xlu0 %46, %v42
  %v48 = vpop.permute.xlu0 %47
  %51 = vset.pattern.permute.xlu0 0
  %52 = vperm.xlu0 %51, %v43
  %v53 = vpop.permute.xlu0 %52
  %56 = vset.pattern.permute.xlu0 0
  %57 = vperm.xlu0 %56, %v44
  %v58 = vpop.permute.xlu0 %57
  %v63 = vunpack.c.l.b16 %v15
  %v64 = vunpack.c.h.b16 %v15
  %v65 = vunpack.c.l.b16 %v16
  %v66 = vunpack.c.h.b16 %v16
  %v67 = vunpack.c.l.b16 %v17
  %v68 = vunpack.c.h.b16 %v17
  %v69 = vpack.c.b16 %v65, %v63
  %v70 = vpack.c.b16 %v66, %v64
  %v71 = vpack.c.b16 %v67, %v67
  %v72 = vpack.c.b16 %v68, %v68
  %v99 = vunpack.c.l.b16 %v18
  %v100 = vunpack.c.l.b16 %v19
  %v101 = vunpack.c.l.b16 %v20
  %v102 = vunpack.c.l.b16 %v21
  %v103 = vunpack.c.l.b16 %v22
  %v104 = vunpack.c.l.b16 %v23
  %v105 = vunpack.c.l.b16 %v24
  %v106 = vunpack.c.l.b16 %v25
  %v107 = vunpack.c.l.b16 %v26
  %v108 = vunpack.c.l.b16 %v27
  %v109 = vunpack.c.l.b16 %v28
  %v110 = vunpack.c.l.b16 %v29
  %v111 = vunpack.c.l.b16 %v30
  %v112 = vunpack.c.l.b16 %v31
  %v113 = vunpack.c.l.b16 %v32
  %v114 = vunpack.c.l.b16 %v33
  %v115 = vunpack.c.l.b16 %v34
  %v116 = vunpack.c.l.b16 %v35
  %v117 = vunpack.c.l.b16 %v36
  %v118 = vunpack.c.l.b16 %v37
  %v119 = vunpack.c.l.b16 %v38
  %v120 = vunpack.c.l.b16 %v39
  %v121 = vunpack.c.l.b16 %v40
  %v122 = vunpack.c.l.b16 %v41
  %v123 = vpack.c.b16 %v100, %v99
  %v124 = vpack.c.b16 %v102, %v101
  %v125 = vpack.c.b16 %v104, %v103
  %v126 = vpack.c.b16 %v106, %v105
  %v127 = vpack.c.b16 %v108, %v107
  %v128 = vpack.c.b16 %v110, %v109
  %v129 = vpack.c.b16 %v112, %v111
  %v130 = vpack.c.b16 %v114, %v113
  %v131 = vpack.c.b16 %v116, %v115
  %v132 = vpack.c.b16 %v118, %v117
  %v133 = vpack.c.b16 %v120, %v119
  %v134 = vpack.c.b16 %v122, %v121
  %vm147 = vcmask 523264
  %v149 = vsel %vm147, %v70, 0
  %v152 = vsel %vm147, %v72, 0
  %154 = vmatprep.subr.bf16.mxu0 0
  %155 = vmatpush1.bf16.msra.mxu0 %v123
  %156 = vmatprep.subr.bf16.mxu0 0
  %157 = vmatpush1.bf16.msra.mxu0 %v124
  %158 = vmatprep.subr.bf16.mxu0 0
  %159 = vmatpush1.bf16.msra.mxu0 %v125
  %160 = vmatprep.subr.bf16.mxu0 0
  %161 = vmatpush1.bf16.msra.mxu0 %v126
  %162 = vmatprep.subr.bf16.mxu0 0
  %163 = vmatpush1.bf16.msra.mxu0 %v127
  %164 = vmatprep.subr.bf16.mxu0 0
  %165 = vmatpush1.bf16.msra.mxu0 %v128
  %166 = vmatprep.subr.bf16.mxu0 0
  %167 = vmatpush1.bf16.msra.mxu0 %v129
  %168 = vmatprep.subr.bf16.mxu0 0
  %169 = vmatpush1.bf16.msra.mxu0 %v130
  %170 = vmatprep.subr.bf16.mxu0 0
  %171 = vmatpush1.bf16.msra.mxu0 %v131
  %172 = vmatprep.subr.bf16.mxu0 0
  %173 = vmatpush1.bf16.msra.mxu0 %v132
  %174 = vmatprep.subr.bf16.mxu0 0
  %175 = vmatpush1.bf16.msra.mxu0 %v133
  %176 = vmatprep.subr.bf16.mxu0 0
  %177 = vmatpush1.bf16.msra.mxu0 %v134
  %178 = vmatprep.subr.bf16.mxu0 0
  %179 = vmatpush1.bf16.msra.mxu0 0
  %180 = vmatprep.subr.bf16.mxu0 0
  %181 = vmatpush1.bf16.msra.mxu0 0
  %182 = vmatprep.subr.bf16.mxu0 0
  %183 = vmatpush1.bf16.msra.mxu0 0
  %184 = vmatprep.subr.bf16.mxu0 0
  %185 = vmatpush1.bf16.msra.mxu0 0
  %186 = vmatprep.mubr.bf16.mxu0 %v149
  %187 = vmatmul.mubr.bf16.gmra.mrb[0].mxu0 %v69
  %v188 = vpop.f32.mrb[0].mxu0
  %v189 = vadd.f32 %v48, %v188
  %v190 = vpop.f32.mrb[0].mxu0
  %v191 = vpop.f32.mrb[0].mxu0
  %v192 = vadd.f32 %v53, %v191
  %v193 = vpop.f32.mrb[0].mxu0
  %194 = vmatprep.mubr.bf16.mxu0 %v152
  %195 = vmatmul.mubr.bf16.gmra.mrb[0].mxu0 %v71
  %v196 = vpop.f32.mrb[0].mxu0
  %v197 = vadd.f32 %v58, %v196
  %v198 = vpop.f32.mrb[0].mxu0
  %v199 = vpop.f32.mrb[0].mxu0
  %v200 = vpop.f32.mrb[0].mxu0
  %201 = vdwg.mxu0
  %v202 = vmax.f32 %v189, 0.0
  %v203 = vmax.f32 %v192, 0.0
  %v204 = vmax.f32 %v197, 0.0
  %vm205 = vcmask 261120
  %206 = vst.msk [vmem:[%s3] sm:$0xff] %vm205, %v202
  %207 = vst.msk [vmem:[%s3 + $0x8] sm:$0xff] %vm205, %v203
  %208 = vst.msk [vmem:[%s3 + $0x10] sm:$0xff] %vm205, %v204
  // Predicated region
  $region14: #{vae_forward.7} parent=0 // pred_check
    _
  $region15: #{vae_forward.7} parent=0 // pred_check_branch
    %210 = sbr.rel (0) target = $region17
  $region16: #{vae_forward.7} parent=0 // pred_region
    _
  $region17: #{vae_forward.7} parent=0 // pred_fallthru
    _
  // Predicated region
  $region18: #{vae_forward.7} parent=0 // pred_check
    _
  $region19: #{vae_forward.7} parent=0 // pred_check_branch
    %212 = sbr.rel (0) target = $region21
  $region20: #{vae_forward.7} parent=0 // pred_region
    _
  $region21: #{vae_forward.7} parent=0 // pred_fallthru
    _

// kernel: vae_forward.8
$region0: #{vae_forward.8}
  #allocation0 [shape = 'u32[]', space=smem, size = 0x4, offset = 0x4, fixed_abs, tag = 'smem constant byte address 0x4 - core index']
  #allocation1 [shape = 'u32[144,128]{1,0:T(1,128)}', space=vmem, size = 0x12000, scoped, tag = 'internal scratch']
  %s0 = inlined_call_operand.vmem [shape: bf16[96,384], index: 0, kind: input, shape index: {}]
  %s1 = inlined_call_operand.vmem [shape: bf16[384,8], index: 1, kind: input, shape index: {}]
  %s2 = inlined_call_operand.vmem [shape: f32[96,1], index: 2, kind: input, shape index: {}]
  %s3 = inlined_call_operand.vmem [shape: f32[48,8], index: 3, kind: input, shape index: {}]
  %s4 = inlined_call_operand.vmem [shape: f32[48,8], index: 4, kind: output, shape index: {0}]
  %s5 = inlined_call_operand.vmem [shape: f32[48,8], index: 5, kind: output, shape index: {1}]
  %s6 = inlined_call_operand.vmem [shape: f32[48,8], index: 6, kind: output, shape index: {2}]
  %7 = xla_tuple %s4, %s5, %s6
  %s8 = sld [smem:[#allocation0]]
  $region42: #{vae_forward.8} parent=0
    _
  %s10 = ssub.s32 1, %s8
  %s11 = scalar_select 0, %s10, %s8
  // Predicated region
  $region2: #{vae_forward.8} parent=0 // pred_check
    _
  $region3: #{vae_forward.8} parent=0 // pred_check_branch
    %13 = sbr.rel (0) target = $region5
  $region4: #{vae_forward.8} parent=0 // pred_region
    _
  $region5: #{vae_forward.8} parent=0 // pred_fallthru
    _
  // Predicated region
  $region6: #{vae_forward.8} parent=0 // pred_check
    _
  $region7: #{vae_forward.8} parent=0 // pred_check_branch
    %15 = sbr.rel (0) target = $region9
  $region8: #{vae_forward.8} parent=0 // pred_region
    _
  $region9: #{vae_forward.8} parent=0 // pred_fallthru
    _
  // Predicated region
  $region10: #{vae_forward.8} parent=0 // pred_check
    _
  $region11: #{vae_forward.8} parent=0 // pred_check_branch
    %17 = sbr.rel (0) target = $region13
  $region12: #{vae_forward.8} parent=0 // pred_region
    _
  $region13: #{vae_forward.8} parent=0 // pred_fallthru
    _
  // Predicated region
  $region14: #{vae_forward.8} parent=0 // pred_check
    _
  $region15: #{vae_forward.8} parent=0 // pred_check_branch
    %19 = sbr.rel (0) target = $region17
  $region16: #{vae_forward.8} parent=0 // pred_region
    _
  $region17: #{vae_forward.8} parent=0 // pred_fallthru
    _
  %v21 = vld [vmem:[%s0] sm:$0xff]
  %v22 = vld [vmem:[%s0 + $0x8] sm:$0xf]
  %v23 = vld [vmem:[%s0 + $0xc] sm:$0xff]
  %v24 = vld [vmem:[%s0 + $0x14] sm:$0xf]
  %v25 = vld [vmem:[%s0 + $0x18] sm:$0xff]
  %v26 = vld [vmem:[%s0 + $0x20] sm:$0xf]
  %v27 = vld [vmem:[%s0 + $0x24] sm:$0xff]
  %v28 = vld [vmem:[%s0 + $0x2c] sm:$0xf]
  %v29 = vld [vmem:[%s0 + $0x30] sm:$0xff]
  %v30 = vld [vmem:[%s0 + $0x38] sm:$0xf]
  %v31 = vld [vmem:[%s0 + $0x3c] sm:$0xff]
  %v32 = vld [vmem:[%s0 + $0x44] sm:$0xf]
  %v33 = vld [vmem:[%s0 + $0x48] sm:$0xff]
  %v34 = vld [vmem:[%s0 + $0x50] sm:$0xf]
  %v35 = vld [vmem:[%s0 + $0x54] sm:$0xff]
  %v36 = vld [vmem:[%s0 + $0x5c] sm:$0xf]
  %v37 = vld [vmem:[%s0 + $0x60] sm:$0xff]
  %v38 = vld [vmem:[%s0 + $0x68] sm:$0xf]
  %v39 = vld [vmem:[%s0 + $0x6c] sm:$0xff]
  %v40 = vld [vmem:[%s0 + $0x74] sm:$0xf]
  %v41 = vld [vmem:[%s0 + $0x78] sm:$0xff]
  %v42 = vld [vmem:[%s0 + $0x80] sm:$0xf]
  %v43 = vld [vmem:[%s0 + $0x84] sm:$0xff]
  %v44 = vld [vmem:[%s0 + $0x8c] sm:$0xf]
  %v45 = vld [vmem:[%s1] sm:$0xf]
  %v46 = vld [vmem:[%s1 + $0x4] sm:$0xf]
  %v47 = vld [vmem:[%s1 + $0x8] sm:$0xf]
  %v48 = vld [vmem:[%s1 + $0xc] sm:$0xf]
  %v49 = vld [vmem:[%s1 + $0x10] sm:$0xf]
  %v50 = vld [vmem:[%s1 + $0x14] sm:$0xf]
  %v51 = vld [vmem:[%s1 + $0x18] sm:$0xf]
  %v52 = vld [vmem:[%s1 + $0x1c] sm:$0xf]
  %v53 = vld [vmem:[%s1 + $0x20] sm:$0xf]
  %v54 = vld [vmem:[%s1 + $0x24] sm:$0xf]
  %v55 = vld [vmem:[%s1 + $0x28] sm:$0xf]
  %v56 = vld [vmem:[%s1 + $0x2c] sm:$0xf]
  %v57 = vld [vmem:[%s1 + $0x30] sm:$0xf]
  %v58 = vld [vmem:[%s1 + $0x34] sm:$0xf]
  %v59 = vld [vmem:[%s1 + $0x38] sm:$0xf]
  %v60 = vld [vmem:[%s1 + $0x3c] sm:$0xf]
  %v61 = vld [vmem:[%s1 + $0x40] sm:$0xf]
  %v62 = vld [vmem:[%s1 + $0x44] sm:$0xf]
  %v63 = vld [vmem:[%s1 + $0x48] sm:$0xf]
  %v64 = vld [vmem:[%s1 + $0x4c] sm:$0xf]
  %v65 = vld [vmem:[%s1 + $0x50] sm:$0xf]
  %v66 = vld [vmem:[%s1 + $0x54] sm:$0xf]
  %v67 = vld [vmem:[%s1 + $0x58] sm:$0xf]
  %v68 = vld [vmem:[%s1 + $0x5c] sm:$0xf]
  %v69 = vld [vmem:[%s1 + $0x60] sm:$0xf]
  %v70 = vld [vmem:[%s1 + $0x64] sm:$0xf]
  %v71 = vld [vmem:[%s1 + $0x68] sm:$0xf]
  %v72 = vld [vmem:[%s1 + $0x6c] sm:$0xf]
  %v73 = vld [vmem:[%s1 + $0x70] sm:$0xf]
  %v74 = vld [vmem:[%s1 + $0x74] sm:$0xf]
  %v75 = vld [vmem:[%s1 + $0x78] sm:$0xf]
  %v76 = vld [vmem:[%s1 + $0x7c] sm:$0xf]
  %v77 = vld [vmem:[%s1 + $0x80] sm:$0xf]
  %v78 = vld [vmem:[%s1 + $0x84] sm:$0xf]
  %v79 = vld [vmem:[%s1 + $0x88] sm:$0xf]
  %v80 = vld [vmem:[%s1 + $0x8c] sm:$0xf]
  %v81 = vld [vmem:[%s1 + $0x90] sm:$0xf]
  %v82 = vld [vmem:[%s1 + $0x94] sm:$0xf]
  %v83 = vld [vmem:[%s1 + $0x98] sm:$0xf]
  %v84 = vld [vmem:[%s1 + $0x9c] sm:$0xf]
  %v85 = vld [vmem:[%s1 + $0xa0] sm:$0xf]
  %v86 = vld [vmem:[%s1 + $0xa4] sm:$0xf]
  %v87 = vld [vmem:[%s1 + $0xa8] sm:$0xf]
  %v88 = vld [vmem:[%s1 + $0xac] sm:$0xf]
  %v89 = vld [vmem:[%s1 + $0xb0] sm:$0xf]
  %v90 = vld [vmem:[%s1 + $0xb4] sm:$0xf]
  %v91 = vld [vmem:[%s1 + $0xb8] sm:$0xf]
  %v92 = vld [vmem:[%s1 + $0xbc] sm:$0xf]
  %v93 = vld [vmem:[%s2] sm:$0xff]
  %v94 = vld [vmem:[%s2 + $0x8] sm:$0xff]
  %v95 = vld [vmem:[%s2 + $0x10] sm:$0xff]
  %v96 = vld [vmem:[%s2 + $0x18] sm:$0xff]
  %v97 = vld [vmem:[%s2 + $0x20] sm:$0xff]
  %v98 = vld [vmem:[%s2 + $0x28] sm:$0xff]
  %v99 = vld [vmem:[%s2 + $0x30] sm:$0xff]
  %v100 = vld [vmem:[%s2 + $0x38] sm:$0xff]
  %v101 = vld [vmem:[%s2 + $0x40] sm:$0xff]
  %v102 = vld [vmem:[%s2 + $0x48] sm:$0xff]
  %v103 = vld [vmem:[%s2 + $0x50] sm:$0xff]
  %v104 = vld [vmem:[%s2 + $0x58] sm:$0xff]
  %106 = vset.pattern.permute.xlu0 0
  %107 = vperm.xlu0 %106, %v93
  %v108 = vpop.permute.xlu0 %107
  %111 = vset.pattern.permute.xlu0 0
  %112 = vperm.xlu0 %111, %v94
  %v113 = vpop.permute.xlu0 %112
  %116 = vset.pattern.permute.xlu0 0
  %117 = vperm.xlu0 %116, %v95
  %v118 = vpop.permute.xlu0 %117
  %121 = vset.pattern.permute.xlu0 0
  %122 = vperm.xlu0 %121, %v96
  %v123 = vpop.permute.xlu0 %122
  %126 = vset.pattern.permute.xlu0 0
  %127 = vperm.xlu0 %126, %v97
  %v128 = vpop.permute.xlu0 %127
  %131 = vset.pattern.permute.xlu0 0
  %132 = vperm.xlu0 %131, %v98
  %v133 = vpop.permute.xlu0 %132
  %136 = vset.pattern.permute.xlu0 0
  %137 = vperm.xlu0 %136, %v99
  %v138 = vpop.permute.xlu0 %137
  %141 = vset.pattern.permute.xlu0 0
  %142 = vperm.xlu0 %141, %v100
  %v143 = vpop.permute.xlu0 %142
  %146 = vset.pattern.permute.xlu0 0
  %147 = vperm.xlu0 %146, %v101
  %v148 = vpop.permute.xlu0 %147
  %151 = vset.pattern.permute.xlu0 0
  %152 = vperm.xlu0 %151, %v102
  %v153 = vpop.permute.xlu0 %152
  %156 = vset.pattern.permute.xlu0 0
  %157 = vperm.xlu0 %156, %v103
  %v158 = vpop.permute.xlu0 %157
  %161 = vset.pattern.permute.xlu0 0
  %162 = vperm.xlu0 %161, %v104
  %v163 = vpop.permute.xlu0 %162
  %v189 = vunpack.c.l.b16 %v21
  %v190 = vunpack.c.h.b16 %v21
  %v191 = vunpack.c.l.b16 %v22
  %v192 = vunpack.c.l.b16 %v23
  %v193 = vunpack.c.h.b16 %v23
  %v194 = vunpack.c.l.b16 %v24
  %v195 = vunpack.c.l.b16 %v25
  %v196 = vunpack.c.h.b16 %v25
  %v197 = vunpack.c.l.b16 %v26
  %v198 = vunpack.c.l.b16 %v27
  %v199 = vunpack.c.h.b16 %v27
  %v200 = vunpack.c.l.b16 %v28
  %v201 = vunpack.c.l.b16 %v29
  %v202 = vunpack.c.h.b16 %v29
  %v203 = vunpack.c.l.b16 %v30
  %v204 = vunpack.c.l.b16 %v31
  %v205 = vunpack.c.h.b16 %v31
  %v206 = vunpack.c.l.b16 %v32
  %v207 = vunpack.c.l.b16 %v33
  %v208 = vunpack.c.h.b16 %v33
  %v209 = vunpack.c.l.b16 %v34
  %v210 = vunpack.c.l.b16 %v35
  %v211 = vunpack.c.h.b16 %v35
  %v212 = vunpack.c.l.b16 %v36
  %v213 = vunpack.c.l.b16 %v37
  %v214 = vunpack.c.h.b16 %v37
  %v215 = vunpack.c.l.b16 %v38
  %v216 = vunpack.c.l.b16 %v39
  %v217 = vunpack.c.h.b16 %v39
  %v218 = vunpack.c.l.b16 %v40
  %v219 = vunpack.c.l.b16 %v41
  %v220 = vunpack.c.h.b16 %v41
  %v221 = vunpack.c.l.b16 %v42
  %v222 = vunpack.c.l.b16 %v43
  %v223 = vunpack.c.h.b16 %v43
  %v224 = vunpack.c.l.b16 %v44
  %v225 = vpack.c.b16 %v192, %v189
  %v226 = vpack.c.b16 %v193, %v190
  %v227 = vpack.c.b16 %v194, %v191
  %v228 = vpack.c.b16 %v198, %v195
  %v229 = vpack.c.b16 %v199, %v196
  %v230 = vpack.c.b16 %v200, %v197
  %v231 = vpack.c.b16 %v204, %v201
  %v232 = vpack.c.b16 %v205, %v202
  %v233 = vpack.c.b16 %v206, %v203
  %v234 = vpack.c.b16 %v210, %v207
  %v235 = vpack.c.b16 %v211, %v208
  %v236 = vpack.c.b16 %v212, %v209
  %v237 = vpack.c.b16 %v216, %v213
  %v238 = vpack.c.b16 %v217, %v214
  %v239 = vpack.c.b16 %v218, %v215
  %v240 = vpack.c.b16 %v222, %v219
  %v241 = vpack.c.b16 %v223, %v220
  %v242 = vpack.c.b16 %v224, %v221
  %v309 = vunpack.c.l.b16 %v45
  %v310 = vunpack.c.l.b16 %v46
  %v311 = vunpack.c.l.b16 %v47
  %v312 = vunpack.c.l.b16 %v48
  %v313 = vunpack.c.l.b16 %v49
  %v314 = vunpack.c.l.b16 %v50
  %v315 = vunpack.c.l.b16 %v51
  %v316 = vunpack.c.l.b16 %v52
  %v317 = vunpack.c.l.b16 %v53
  %v318 = vunpack.c.l.b16 %v54
  %v319 = vunpack.c.l.b16 %v55
  %v320 = vunpack.c.l.b16 %v56
  %v321 = vunpack.c.l.b16 %v57
  %v322 = vunpack.c.l.b16 %v58
  %v323 = vunpack.c.l.b16 %v59
  %v324 = vunpack.c.l.b16 %v60
  %v325 = vunpack.c.l.b16 %v61
  %v326 = vunpack.c.l.b16 %v62
  %v327 = vunpack.c.l.b16 %v63
  %v328 = vunpack.c.l.b16 %v64
  %v329 = vunpack.c.l.b16 %v65
  %v330 = vunpack.c.l.b16 %v66
  %v331 = vunpack.c.l.b16 %v67
  %v332 = vunpack.c.l.b16 %v68
  %v333 = vunpack.c.l.b16 %v69
  %v334 = vunpack.c.l.b16 %v70
  %v335 = vunpack.c.l.b16 %v71
  %v336 = vunpack.c.l.b16 %v72
  %v337 = vunpack.c.l.b16 %v73
  %v338 = vunpack.c.l.b16 %v74
  %v339 = vunpack.c.l.b16 %v75
  %v340 = vunpack.c.l.b16 %v76
  %v341 = vunpack.c.l.b16 %v77
  %v342 = vunpack.c.l.b16 %v78
  %v343 = vunpack.c.l.b16 %v79
  %v344 = vunpack.c.l.b16 %v80
  %v345 = vunpack.c.l.b16 %v81
  %v346 = vunpack.c.l.b16 %v82
  %v347 = vunpack.c.l.b16 %v83
  %v348 = vunpack.c.l.b16 %v84
  %v349 = vunpack.c.l.b16 %v85
  %v350 = vunpack.c.l.b16 %v86
  %v351 = vunpack.c.l.b16 %v87
  %v352 = vunpack.c.l.b16 %v88
  %v353 = vunpack.c.l.b16 %v89
  %v354 = vunpack.c.l.b16 %v90
  %v355 = vunpack.c.l.b16 %v91
  %v356 = vunpack.c.l.b16 %v92
  %v357 = vpack.c.b16 %v310, %v309
  %v358 = vpack.c.b16 %v312, %v311
  %v359 = vpack.c.b16 %v314, %v313
  %v360 = vpack.c.b16 %v316, %v315
  %v361 = vpack.c.b16 %v318, %v317
  %v362 = vpack.c.b16 %v320, %v319
  %v363 = vpack.c.b16 %v322, %v321
  %v364 = vpack.c.b16 %v324, %v323
  %v365 = vpack.c.b16 %v326, %v325
  %v366 = vpack.c.b16 %v328, %v327
  %v367 = vpack.c.b16 %v330, %v329
  %v368 = vpack.c.b16 %v332, %v331
  %v369 = vpack.c.b16 %v334, %v333
  %v370 = vpack.c.b16 %v336, %v335
  %v371 = vpack.c.b16 %v338, %v337
  %v372 = vpack.c.b16 %v340, %v339
  %v373 = vpack.c.b16 %v342, %v341
  %v374 = vpack.c.b16 %v344, %v343
  %v375 = vpack.c.b16 %v346, %v345
  %v376 = vpack.c.b16 %v348, %v347
  %v377 = vpack.c.b16 %v350, %v349
  %v378 = vpack.c.b16 %v352, %v351
  %v379 = vpack.c.b16 %v354, %v353
  %v380 = vpack.c.b16 %v356, %v355
  %405 = vmatprep.subr.bf16.mxu0 0
  %406 = vmatpush1.bf16.msra.mxu0 %v357
  %407 = vmatprep.subr.bf16.mxu0 0
  %408 = vmatpush1.bf16.msra.mxu0 %v358
  %409 = vmatprep.subr.bf16.mxu0 0
  %410 = vmatpush1.bf16.msra.mxu0 %v359
  %411 = vmatprep.subr.bf16.mxu0 0
  %412 = vmatpush1.bf16.msra.mxu0 %v360
  %413 = vmatprep.subr.bf16.mxu0 0
  %414 = vmatpush1.bf16.msra.mxu0 %v361
  %415 = vmatprep.subr.bf16.mxu0 0
  %416 = vmatpush1.bf16.msra.mxu0 %v362
  %417 = vmatprep.subr.bf16.mxu0 0
  %418 = vmatpush1.bf16.msra.mxu0 %v363
  %419 = vmatprep.subr.bf16.mxu0 0
  %420 = vmatpush1.bf16.msra.mxu0 %v364
  %421 = vmatprep.subr.bf16.mxu0 0
  %422 = vmatpush1.bf16.msra.mxu0 %v365
  %423 = vmatprep.subr.bf16.mxu0 0
  %424 = vmatpush1.bf16.msra.mxu0 %v366
  %425 = vmatprep.subr.bf16.mxu0 0
  %426 = vmatpush1.bf16.msra.mxu0 %v367
  %427 = vmatprep.subr.bf16.mxu0 0
  %428 = vmatpush1.bf16.msra.mxu0 %v368
  %429 = vmatprep.subr.bf16.mxu0 0
  %430 = vmatpush1.bf16.msra.mxu0 %v369
  %431 = vmatprep.subr.bf16.mxu0 0
  %432 = vmatpush1.bf16.msra.mxu0 %v370
  %433 = vmatprep.subr.bf16.mxu0 0
  %434 = vmatpush1.bf16.msra.mxu0 %v371
  %435 = vmatprep.subr.bf16.mxu0 0
  %436 = vmatpush1.bf16.msra.mxu0 %v372
  %437 = vmatprep.mubr.bf16.mxu0 %v226
  %438 = vmatmul.mubr.bf16.gmra.mrb[0].mxu0 %v225
  %v439 = vpop.f32.mrb[0].mxu0
  %v440 = vadd.f32 %v108, %v439
  %v441 = vpop.f32.mrb[0].mxu0
  %v442 = vpop.f32.mrb[0].mxu0
  %v443 = vadd.f32 %v113, %v442
  %v444 = vpop.f32.mrb[0].mxu0
  %445 = vmatprep.mubr.bf16.mxu0 %v229
  %446 = vmatmul.mubr.bf16.gmra.mrb[0].mxu0 %v228
  %v447 = vpop.f32.mrb[0].mxu0
  %v448 = vadd.f32 %v118, %v447
  %v449 = vpop.f32.mrb[0].mxu0
  %v450 = vpop.f32.mrb[0].mxu0
  %v451 = vadd.f32 %v123, %v450
  %v452 = vpop.f32.mrb[0].mxu0
  %453 = vmatprep.mubr.bf16.mxu0 %v232
  %454 = vmatmul.mubr.bf16.gmra.mrb[0].mxu0 %v231
  %v455 = vpop.f32.mrb[0].mxu0
  %v456 = vadd.f32 %v128, %v455
  %v457 = vpop.f32.mrb[0].mxu0
  %v458 = vpop.f32.mrb[0].mxu0
  %v459 = vadd.f32 %v133, %v458
  %v460 = vpop.f32.mrb[0].mxu0
  %461 = vmatprep.mubr.bf16.mxu0 %v235
  %462 = vmatmul.mubr.bf16.gmra.mrb[0].mxu0 %v234
  %v463 = vpop.f32.mrb[0].mxu0
  %v464 = vadd.f32 %v138, %v463
  %v465 = vpop.f32.mrb[0].mxu0
  %v466 = vpop.f32.mrb[0].mxu0
  %v467 = vadd.f32 %v143, %v466
  %v468 = vpop.f32.mrb[0].mxu0
  %469 = vmatprep.mubr.bf16.mxu0 %v238
  %470 = vmatmul.mubr.bf16.gmra.mrb[0].mxu0 %v237
  %v471 = vpop.f32.mrb[0].mxu0
  %v472 = vadd.f32 %v148, %v471
  %v473 = vpop.f32.mrb[0].mxu0
  %v474 = vpop.f32.mrb[0].mxu0
  %v475 = vadd.f32 %v153, %v474
  %v476 = vpop.f32.mrb[0].mxu0
  %477 = vmatprep.mubr.bf16.mxu0 %v241
  %478 = vmatmul.mubr.bf16.gmra.mrb[0].mxu0 %v240
  %v479 = vpop.f32.mrb[0].mxu0
  %v480 = vadd.f32 %v158, %v479
  %v481 = vpop.f32.mrb[0].mxu0
  %v482 = vpop.f32.mrb[0].mxu0
  %v483 = vadd.f32 %v163, %v482
  %v484 = vpop.f32.mrb[0].mxu0
  %485 = vdwg.mxu0
  %486 = vmatprep.subr.bf16.mxu0 0
  %487 = vmatpush1.bf16.msra.mxu0 %v373
  %488 = vmatprep.subr.bf16.mxu0 0
  %489 = vmatpush1.bf16.msra.mxu0 %v374
  %490 = vmatprep.subr.bf16.mxu0 0
  %491 = vmatpush1.bf16.msra.mxu0 %v375
  %492 = vmatprep.subr.bf16.mxu0 0
  %493 = vmatpush1.bf16.msra.mxu0 %v376
  %494 = vmatprep.subr.bf16.mxu0 0
  %495 = vmatpush1.bf16.msra.mxu0 %v377
  %496 = vmatprep.subr.bf16.mxu0 0
  %497 = vmatpush1.bf16.msra.mxu0 %v378
  %498 = vmatprep.subr.bf16.mxu0 0
  %499 = vmatpush1.bf16.msra.mxu0 %v379
  %500 = vmatprep.subr.bf16.mxu0 0
  %501 = vmatpush1.bf16.msra.mxu0 %v380
  %502 = vmatprep.subr.bf16.mxu0 0
  %503 = vmatpush1.bf16.msra.mxu0 0
  %504 = vmatprep.subr.bf16.mxu0 0
  %505 = vmatpush1.bf16.msra.mxu0 0
  %506 = vmatprep.subr.bf16.mxu0 0
  %507 = vmatpush1.bf16.msra.mxu0 0
  %508 = vmatprep.subr.bf16.mxu0 0
  %509 = vmatpush1.bf16.msra.mxu0 0
  %510 = vmatprep.subr.bf16.mxu0 0
  %511 = vmatpush1.bf16.msra.mxu0 0
  %512 = vmatprep.subr.bf16.mxu0 0
  %513 = vmatpush1.bf16.msra.mxu0 0
  %514 = vmatprep.subr.bf16.mxu0 0
  %515 = vmatpush1.bf16.msra.mxu0 0
  %516 = vmatprep.subr.bf16.mxu0 0
  %517 = vmatpush1.bf16.msra.mxu0 0
  %518 = vmatprep.mubr.bf16.mxu0 0
  %519 = vmatmul.mubr.bf16.gmra.mrb[0].mxu0 %v227
  %v520 = vpop.f32.mrb[0].mxu0
  %v521 = vadd.f32 %v440, %v520
  %v522 = vpop.f32.mrb[0].mxu0
  %v523 = vpop.f32.mrb[0].mxu0
  %v524 = vadd.f32 %v443, %v523
  %v525 = vpop.f32.mrb[0].mxu0
  %526 = vmatprep.mubr.bf16.mxu0 0
  %527 = vmatmul.mubr.bf16.gmra.mrb[0].mxu0 %v230
  %v528 = vpop.f32.mrb[0].mxu0
  %v529 = vadd.f32 %v448, %v528
  %v530 = vpop.f32.mrb[0].mxu0
  %v531 = vpop.f32.mrb[0].mxu0
  %v532 = vadd.f32 %v451, %v531
  %v533 = vpop.f32.mrb[0].mxu0
  %534 = vmatprep.mubr.bf16.mxu0 0
  %535 = vmatmul.mubr.bf16.gmra.mrb[0].mxu0 %v233
  %v536 = vpop.f32.mrb[0].mxu0
  %v537 = vadd.f32 %v456, %v536
  %v538 = vpop.f32.mrb[0].mxu0
  %v539 = vpop.f32.mrb[0].mxu0
  %v540 = vadd.f32 %v459, %v539
  %v541 = vpop.f32.mrb[0].mxu0
  %542 = vmatprep.mubr.bf16.mxu0 0
  %543 = vmatmul.mubr.bf16.gmra.mrb[0].mxu0 %v236
  %v544 = vpop.f32.mrb[0].mxu0
  %v545 = vadd.f32 %v464, %v544
  %v546 = vpop.f32.mrb[0].mxu0
  %v547 = vpop.f32.mrb[0].mxu0
  %v548 = vadd.f32 %v467, %v547
  %v549 = vpop.f32.mrb[0].mxu0
  %550 = vmatprep.mubr.bf16.mxu0 0
  %551 = vmatmul.mubr.bf16.gmra.mrb[0].mxu0 %v239
  %v552 = vpop.f32.mrb[0].mxu0
  %v553 = vadd.f32 %v472, %v552
  %v554 = vpop.f32.mrb[0].mxu0
  %v555 = vpop.f32.mrb[0].mxu0
  %v556 = vadd.f32 %v475, %v555
  %v557 = vpop.f32.mrb[0].mxu0
  %558 = vmatprep.mubr.bf16.mxu0 0
  %559 = vmatmul.mubr.bf16.gmra.mrb[0].mxu0 %v242
  %v560 = vpop.f32.mrb[0].mxu0
  %v561 = vadd.f32 %v480, %v560
  %v562 = vpop.f32.mrb[0].mxu0
  %v563 = vpop.f32.mrb[0].mxu0
  %v564 = vadd.f32 %v483, %v563
  %v565 = vpop.f32.mrb[0].mxu0
  %566 = vdwg.mxu0
  %v567 = vmax.f32 %v521, 0.0
  %v568 = vmax.f32 %v524, 0.0
  %v569 = vmax.f32 %v529, 0.0
  %v570 = vmax.f32 %v532, 0.0
  %v571 = vmax.f32 %v537, 0.0
  %v572 = vmax.f32 %v540, 0.0
  %v573 = vmax.f32 %v545, 0.0
  %v574 = vmax.f32 %v548, 0.0
  %v575 = vmax.f32 %v553, 0.0
  %v576 = vmax.f32 %v556, 0.0
  %v577 = vmax.f32 %v561, 0.0
  %v578 = vmax.f32 %v564, 0.0
  %vm579 = vcmask 64512
  %580 = vst.msk [vmem:[%s4] sm:$0xff] %vm579, %v567
  %581 = vst.msk [vmem:[%s4 + $0x8] sm:$0xff] %vm579, %v568
  %582 = vst.msk [vmem:[%s4 + $0x10] sm:$0xff] %vm579, %v569
  %583 = vst.msk [vmem:[%s4 + $0x18] sm:$0xff] %vm579, %v570
  %584 = vst.msk [vmem:[%s4 + $0x20] sm:$0xff] %vm579, %v571
  %585 = vst.msk [vmem:[%s4 + $0x28] sm:$0xff] %vm579, %v572
  %586 = vst.msk [vmem:[%s5] sm:$0xff] %vm579, %v573
  %587 = vst.msk [vmem:[%s5 + $0x8] sm:$0xff] %vm579, %v574
  %588 = vst.msk [vmem:[%s5 + $0x10] sm:$0xff] %vm579, %v575
  %589 = vst.msk [vmem:[%s5 + $0x18] sm:$0xff] %vm579, %v576
  %590 = vst.msk [vmem:[%s5 + $0x20] sm:$0xff] %vm579, %v577
  %591 = vst.msk [vmem:[%s5 + $0x28] sm:$0xff] %vm579, %v578
  %v592 = vld [vmem:[%s3] sm:$0xff]
  %v593 = vld [vmem:[%s3 + $0x8] sm:$0xff]
  %v594 = vld [vmem:[%s3 + $0x10] sm:$0xff]
  %v595 = vld [vmem:[%s3 + $0x18] sm:$0xff]
  %v596 = vld [vmem:[%s3 + $0x20] sm:$0xff]
  %v597 = vld [vmem:[%s3 + $0x28] sm:$0xff]
  %v598 = vmul.f32 %v573, 0.5
  %v599 = vmul.f32 %v574, 0.5
  %v600 = vmul.f32 %v575, 0.5
  %v601 = vmul.f32 %v576, 0.5
  %v602 = vmul.f32 %v577, 0.5
  %v603 = vmul.f32 %v578, 0.5
  %v604 = vmul.f32 %v598, 1.442695
  %v605 = vpow.pop %v604
  %v606 = vmul.f32 %v599, 1.442695
  %v607 = vpow.pop %v606
  %v608 = vmul.f32 %v600, 1.442695
  %v609 = vpow.pop %v608
  %v610 = vmul.f32 %v601, 1.442695
  %v611 = vpow.pop %v610
  %v612 = vmul.f32 %v602, 1.442695
  %v613 = vpow.pop %v612
  %v614 = vmul.f32 %v603, 1.442695
  %v615 = vpow.pop %v614
  %v616 = vmul.f32 %v592, %v605
  %v617 = vmul.f32 %v593, %v607
  %v618 = vmul.f32 %v594, %v609
  %v619 = vmul.f32 %v595, %v611
  %v620 = vmul.f32 %v596, %v613
  %v621 = vmul.f32 %v597, %v615
  %v622 = vadd.f32 %v616, %v567
  %v623 = vadd.f32 %v617, %v568
  %v624 = vadd.f32 %v618, %v569
  %v625 = vadd.f32 %v619, %v570
  %v626 = vadd.f32 %v620, %v571
  %v627 = vadd.f32 %v621, %v572
  %628 = vst.msk [vmem:[%s6] sm:$0xff] %vm579, %v622
  %629 = vst.msk [vmem:[%s6 + $0x8] sm:$0xff] %vm579, %v623
  %630 = vst.msk [vmem:[%s6 + $0x10] sm:$0xff] %vm579, %v624
  %631 = vst.msk [vmem:[%s6 + $0x18] sm:$0xff] %vm579, %v625
  %632 = vst.msk [vmem:[%s6 + $0x20] sm:$0xff] %vm579, %v626
  %633 = vst.msk [vmem:[%s6 + $0x28] sm:$0xff] %vm579, %v627
  // Predicated region
  $region18: #{vae_forward.8} parent=0 // pred_check
    _
  $region19: #{vae_forward.8} parent=0 // pred_check_branch
    %635 = sbr.rel (0) target = $region21
  $region20: #{vae_forward.8} parent=0 // pred_region
    _
  $region21: #{vae_forward.8} parent=0 // pred_fallthru
    _
  // Predicated region
  $region22: #{vae_forward.8} parent=0 // pred_check
    _
  $region23: #{vae_forward.8} parent=0 // pred_check_branch
    %637 = sbr.rel (0) target = $region25
  $region24: #{vae_forward.8} parent=0 // pred_region
    _
  $region25: #{vae_forward.8} parent=0 // pred_fallthru
    _
  // Predicated region
  $region26: #{vae_forward.8} parent=0 // pred_check
    _
  $region27: #{vae_forward.8} parent=0 // pred_check_branch
    %639 = sbr.rel (0) target = $region29
  $region28: #{vae_forward.8} parent=0 // pred_region
    _
  $region29: #{vae_forward.8} parent=0 // pred_fallthru
    _
  // Predicated region
  $region30: #{vae_forward.8} parent=0 // pred_check
    _
  $region31: #{vae_forward.8} parent=0 // pred_check_branch
    %641 = sbr.rel (0) target = $region33
  $region32: #{vae_forward.8} parent=0 // pred_region
    _
  $region33: #{vae_forward.8} parent=0 // pred_fallthru
    _
  // Predicated region
  $region34: #{vae_forward.8} parent=0 // pred_check
    _
  $region35: #{vae_forward.8} parent=0 // pred_check_branch
    %643 = sbr.rel (0) target = $region37
  $region36: #{vae_forward.8} parent=0 // pred_region
    _
  $region37: #{vae_forward.8} parent=0 // pred_fallthru
    _
  // Predicated region
  $region38: #{vae_forward.8} parent=0 // pred_check
    _
  $region39: #{vae_forward.8} parent=0 // pred_check_branch
    %645 = sbr.rel (0) target = $region41
  $region40: #{vae_forward.8} parent=0 // pred_region
    _
  $region41: #{vae_forward.8} parent=0 // pred_fallthru
    _

// kernel: tile.18
$region0: #{tile.18}
  #allocation0 [shape = 's32[1]{0}', space=sflag, size = 0x4, scoped, tag = 'scoped memory for tile.18']
  %s0 = inlined_call_operand.vmem [shape: f32[24], index: 0, kind: input, shape index: {}]
  %s1 = inlined_call_operand.vmem [shape: f32[4,24], index: 1, kind: output, shape index: {}]
  // Predicated region
  $region2: #{tile.18} parent=0 // pred_check
    _
  $region3: #{tile.18} parent=0 // pred_check_branch
    %3 = sbr.rel (0) target = $region5
  $region4: #{tile.18} parent=0 // pred_region
    _
  $region5: #{tile.18} parent=0 // pred_fallthru
    _
  %v4 = vld [vmem:[%s0] ss:$0 sm:$0xff]
  %5 = vst [vmem:[%s1] sm:$0xf] %v4

// kernel: tile.0
$region0: #{tile.0}
  %s0 = inlined_call_operand.vmem [shape: f32[4,24], index: 0, kind: input, shape index: {}]
  %s1 = inlined_call_operand.vmem [shape: f32[96,1], index: 1, kind: output, shape index: {}]
  $region1: #{tile.0} parent=0
    #allocation0 [shape = 'u8[4096]{0}', space=vmem, size = 0x1000, scoped, tag = 'scoped mem for input reshape']
    %s3 = sshllo.u32 0, 4
    %v4 = vld [vmem:[%s0] sm:%s3]
    %5 = vst [vmem:[#allocation0] sm:%s3] %v4
    %v6 = vld [vmem:[#allocation0] sm:$0xf]
    %vm7 = vcmask 7168
    %8 = vst.msk [vmem:[%s1] ss:$24 sm:$0xf] %vm7, %v6
    %v9 = vld.sshfl [vmem:[#allocation0] sm:$0xff pattern:$0x11111230]
    %10 = vrot.lane.b32.xlu0 %v9, 127
    %v11 = vpop.permute.xlu0 %10
    %vm12 = vcmask 7168
    %s13 = scalar_lea.vmem %s1, 1
    %14 = vst.msk [vmem:[%s13] ss:$72 sm:$0x3] %vm12, %v11
    %s15 = scalar_lea.vmem %s1, 97
    %16 = vst.msk [vmem:[%s15] ss:$-24 sm:$0xc] %vm12, %v11
    %v17 = vld.sshfl [vmem:[#allocation0] sm:$0xff pattern:$0x11111230]
    %18 = vrot.lane.b32.xlu0 %v17, 126
    %v19 = vpop.permute.xlu0 %18
    %vm20 = vcmask 7168
    %s21 = scalar_lea.vmem %s1, 2
    %22 = vst.msk [vmem:[%s21] ss:$72 sm:$0x3] %vm20, %v19
    %s23 = scalar_lea.vmem %s1, 98
    %24 = vst.msk [vmem:[%s23] ss:$-24 sm:$0xc] %vm20, %v19
    %v25 = vld.sshfl [vmem:[#allocation0] sm:$0xff pattern:$0x11111230]
    %26 = vrot.lane.b32.xlu0 %v25, 125
    %v27 = vpop.permute.xlu0 %26
    %vm28 = vcmask 7168
    %s29 = scalar_lea.vmem %s1, 3
    %30 = vst.msk [vmem:[%s29] ss:$72 sm:$0x3] %vm28, %v27
    %s31 = scalar_lea.vmem %s1, 99
    %32 = vst.msk [vmem:[%s31] ss:$-24 sm:$0xc] %vm28, %v27
    %v33 = vld.sshfl [vmem:[#allocation0] sm:$0xff pattern:$0x11111230]
    %34 = vrot.lane.b32.xlu0 %v33, 124
    %v35 = vpop.permute.xlu0 %34
    %vm36 = vcmask 7168
    %s37 = scalar_lea.vmem %s1, 4
    %38 = vst.msk [vmem:[%s37] ss:$72 sm:$0x3] %vm36, %v35
    %s39 = scalar_lea.vmem %s1, 100
    %40 = vst.msk [vmem:[%s39] ss:$-24 sm:$0xc] %vm36, %v35
    %v41 = vld.sshfl [vmem:[#allocation0] sm:$0xff pattern:$0x11111230]
    %42 = vrot.lane.b32.xlu0 %v41, 123
    %v43 = vpop.permute.xlu0 %42
    %vm44 = vcmask 7168
    %s45 = scalar_lea.vmem %s1, 5
    %46 = vst.msk [vmem:[%s45] ss:$72 sm:$0x3] %vm44, %v43
    %s47 = scalar_lea.vmem %s1, 101
    %48 = vst.msk [vmem:[%s47] ss:$-24 sm:$0xc] %vm44, %v43
    %v49 = vld.sshfl [vmem:[#allocation0] sm:$0xff pattern:$0x11111230]
    %50 = vrot.lane.b32.xlu0 %v49, 122
    %v51 = vpop.permute.xlu0 %50
    %vm52 = vcmask 7168
    %s53 = scalar_lea.vmem %s1, 6
    %54 = vst.msk [vmem:[%s53] ss:$72 sm:$0x3] %vm52, %v51
    %s55 = scalar_lea.vmem %s1, 102
    %56 = vst.msk [vmem:[%s55] ss:$-24 sm:$0xc] %vm52, %v51
    %v57 = vld.sshfl [vmem:[#allocation0] sm:$0xff pattern:$0x11111230]
    %58 = vrot.lane.b32.xlu0 %v57, 121
    %v59 = vpop.permute.xlu0 %58
    %vm60 = vcmask 7168
    %s61 = scalar_lea.vmem %s1, 7
    %62 = vst.msk [vmem:[%s61] ss:$72 sm:$0x3] %vm60, %v59
    %s63 = scalar_lea.vmem %s1, 103
    %64 = vst.msk [vmem:[%s63] ss:$-24 sm:$0xc] %vm60, %v59
    %v65 = vld.sshfl [vmem:[#allocation0] sm:$0xff pattern:$0x22222301]
    %66 = vrot.lane.b32.xlu0 %v65, 120
    %v67 = vpop.permute.xlu0 %66
    %vm68 = vcmask 7168
    %s69 = scalar_lea.vmem %s1, 32
    %70 = vst.msk [vmem:[%s69] ss:$-24 sm:$0x3] %vm68, %v67
    %s71 = scalar_lea.vmem %s1, 128
    %72 = vst.msk [vmem:[%s71] ss:$-24 sm:$0xc] %vm68, %v67
    %v73 = vld.sshfl [vmem:[#allocation0] sm:$0xff pattern:$0x22222301]
    %74 = vrot.lane.b32.xlu0 %v73, 119
    %v75 = vpop.permute.xlu0 %74
    %vm76 = vcmask 7168
    %s77 = scalar_lea.vmem %s1, 33
    %78 = vst.msk [vmem:[%s77] ss:$-24 sm:$0x3] %vm76, %v75
    %s79 = scalar_lea.vmem %s1, 129
    %80 = vst.msk [vmem:[%s79] ss:$-24 sm:$0xc] %vm76, %v75
    %v81 = vld.sshfl [vmem:[#allocation0] sm:$0xff pattern:$0x22222301]
    %82 = vrot.lane.b32.xlu0 %v81, 118
    %v83 = vpop.permute.xlu0 %82
    %vm84 = vcmask 7168
    %s85 = scalar_lea.vmem %s1, 34
    %86 = vst.msk [vmem:[%s85] ss:$-24 sm:$0x3] %vm84, %v83
    %s87 = scalar_lea.vmem %s1, 130
    %88 = vst.msk [vmem:[%s87] ss:$-24 sm:$0xc] %vm84, %v83
    %v89 = vld.sshfl [vmem:[#allocation0] sm:$0xff pattern:$0x22222301]
    %90 = vrot.lane.b32.xlu0 %v89, 117
    %v91 = vpop.permute.xlu0 %90
    %vm92 = vcmask 7168
    %s93 = scalar_lea.vmem %s1, 35
    %94 = vst.msk [vmem:[%s93] ss:$-24 sm:$0x3] %vm92, %v91
    %s95 = scalar_lea.vmem %s1, 131
    %96 = vst.msk [vmem:[%s95] ss:$-24 sm:$0xc] %vm92, %v91
    %v97 = vld.sshfl [vmem:[#allocation0] sm:$0xff pattern:$0x22222301]
    %98 = vrot.lane.b32.xlu0 %v97, 116
    %v99 = vpop.permute.xlu0 %98
    %vm100 = vcmask 7168
    %s101 = scalar_lea.vmem %s1, 36
    %102 = vst.msk [vmem:[%s101] ss:$-24 sm:$0x3] %vm100, %v99
    %s103 = scalar_lea.vmem %s1, 132
    %104 = vst.msk [vmem:[%s103] ss:$-24 sm:$0xc] %vm100, %v99
    %v105 = vld.sshfl [vmem:[#allocation0] sm:$0xff pattern:$0x22222301]
    %106 = vrot.lane.b32.xlu0 %v105, 115
    %v107 = vpop.permute.xlu0 %106
    %vm108 = vcmask 7168
    %s109 = scalar_lea.vmem %s1, 37
    %110 = vst.msk [vmem:[%s109] ss:$-24 sm:$0x3] %vm108, %v107
    %s111 = scalar_lea.vmem %s1, 133
    %112 = vst.msk [vmem:[%s111] ss:$-24 sm:$0xc] %vm108, %v107
    %v113 = vld.sshfl [vmem:[#allocation0] sm:$0xff pattern:$0x22222301]
    %114 = vrot.lane.b32.xlu0 %v113, 114
    %v115 = vpop.permute.xlu0 %114
    %vm116 = vcmask 7168
    %s117 = scalar_lea.vmem %s1, 38
    %118 = vst.msk [vmem:[%s117] ss:$-24 sm:$0x3] %vm116, %v115
    %s119 = scalar_lea.vmem %s1, 134
    %120 = vst.msk [vmem:[%s119] ss:$-24 sm:$0xc] %vm116, %v115
    %v121 = vld.sshfl [vmem:[#allocation0] sm:$0xff pattern:$0x22222301]
    %122 = vrot.lane.b32.xlu0 %v121, 113
    %v123 = vpop.permute.xlu0 %122
    %vm124 = vcmask 7168
    %s125 = scalar_lea.vmem %s1, 39
    %126 = vst.msk [vmem:[%s125] ss:$-24 sm:$0x3] %vm124, %v123
    %s127 = scalar_lea.vmem %s1, 135
    %128 = vst.msk [vmem:[%s127] ss:$-24 sm:$0xc] %vm124, %v123
    %v129 = vld.sshfl [vmem:[#allocation0] sm:$0xff pattern:$0x33333012]
    %130 = vrot.lane.b32.xlu0 %v129, 112
    %v131 = vpop.permute.xlu0 %130
    %vm132 = vcmask 7168
    %s133 = scalar_lea.vmem %s1, 64
    %134 = vst.msk [vmem:[%s133] ss:$-24 sm:$0x7] %vm132, %v131
    %s135 = scalar_lea.vmem %s1, 85
    %136 = vst.msk [vmem:[%s135] sm:$0x8] %vm132, %v131
    %v137 = vld.sshfl [vmem:[#allocation0] sm:$0xff pattern:$0x33333012]
    %138 = vrot.lane.b32.xlu0 %v137, 111
    %v139 = vpop.permute.xlu0 %138
    %vm140 = vcmask 7168
    %s141 = scalar_lea.vmem %s1, 65
    %142 = vst.msk [vmem:[%s141] ss:$-24 sm:$0x7] %vm140, %v139
    %s143 = scalar_lea.vmem %s1, 86
    %144 = vst.msk [vmem:[%s143] sm:$0x8] %vm140, %v139
    %v145 = vld.sshfl [vmem:[#allocation0] sm:$0xff pattern:$0x33333012]
    %146 = vrot.lane.b32.xlu0 %v145, 110
    %v147 = vpop.permute.xlu0 %146
    %vm148 = vcmask 7168
    %s149 = scalar_lea.vmem %s1, 66
    %150 = vst.msk [vmem:[%s149] ss:$-24 sm:$0x7] %vm148, %v147
    %s151 = scalar_lea.vmem %s1, 87
    %152 = vst.msk [vmem:[%s151] sm:$0x8] %vm148, %v147
    %v153 = vld.sshfl [vmem:[#allocation0] sm:$0xff pattern:$0x33333012]
    %154 = vrot.lane.b32.xlu0 %v153, 109
    %v155 = vpop.permute.xlu0 %154
    %vm156 = vcmask 7168
    %s157 = scalar_lea.vmem %s1, 67
    %158 = vst.msk [vmem:[%s157] ss:$-24 sm:$0x7] %vm156, %v155
    %s159 = scalar_lea.vmem %s1, 88
    %160 = vst.msk [vmem:[%s159] sm:$0x8] %vm156, %v155
    %v161 = vld.sshfl [vmem:[#allocation0] sm:$0xff pattern:$0x33333012]
    %162 = vrot.lane.b32.xlu0 %v161, 108
    %v163 = vpop.permute.xlu0 %162
    %vm164 = vcmask 7168
    %s165 = scalar_lea.vmem %s1, 68
    %166 = vst.msk [vmem:[%s165] ss:$-24 sm:$0x7] %vm164, %v163
    %s167 = scalar_lea.vmem %s1, 89
    %168 = vst.msk [vmem:[%s167] sm:$0x8] %vm164, %v163
    %v169 = vld.sshfl [vmem:[#allocation0] sm:$0xff pattern:$0x33333012]
    %170 = vrot.lane.b32.xlu0 %v169, 107
    %v171 = vpop.permute.xlu0 %170
    %vm172 = vcmask 7168
    %s173 = scalar_lea.vmem %s1, 69
    %174 = vst.msk [vmem:[%s173] ss:$-24 sm:$0x7] %vm172, %v171
    %s175 = scalar_lea.vmem %s1, 90
    %176 = vst.msk [vmem:[%s175] sm:$0x8] %vm172, %v171
    %v177 = vld.sshfl [vmem:[#allocation0] sm:$0xff pattern:$0x33333012]
    %178 = vrot.lane.b32.xlu0 %v177, 106
    %v179 = vpop.permute.xlu0 %178
    %vm180 = vcmask 7168
    %s181 = scalar_lea.vmem %s1, 70
    %182 = vst.msk [vmem:[%s181] ss:$-24 sm:$0x7] %vm180, %v179
    %s183 = scalar_lea.vmem %s1, 91
    %184 = vst.msk [vmem:[%s183] sm:$0x8] %vm180, %v179
    %v185 = vld.sshfl [vmem:[#allocation0] sm:$0xff pattern:$0x33333012]
    %186 = vrot.lane.b32.xlu0 %v185, 105
    %v187 = vpop.permute.xlu0 %186
    %vm188 = vcmask 7168
    %s189 = scalar_lea.vmem %s1, 71
    %190 = vst.msk [vmem:[%s189] ss:$-24 sm:$0x7] %vm188, %v187
    %s191 = scalar_lea.vmem %s1, 92
    %192 = vst.msk [vmem:[%s191] sm:$0x8] %vm188, %v187

// kernel: vae_forward.9
$region0: #{vae_forward.9}
  #allocation0 [shape = 'u32[]', space=smem, size = 0x4, offset = 0x4, fixed_abs, tag = 'smem constant byte address 0x4 - core index']
  #allocation1 [shape = 'u32[144,128]{1,0:T(1,128)}', space=vmem, size = 0x12000, scoped, tag = 'internal scratch']
  %s0 = inlined_call_operand.vmem [shape: bf16[96,432], index: 0, kind: input, shape index: {}]
  %s1 = inlined_call_operand.vmem [shape: bf16[432,8], index: 1, kind: input, shape index: {}]
  %s2 = inlined_call_operand.vmem [shape: f32[96,1], index: 2, kind: input, shape index: {}]
  %s3 = inlined_call_operand.vmem [shape: f32[96,8], index: 3, kind: output, shape index: {}]
  %s4 = sld [smem:[#allocation0]]
  $region22: #{vae_forward.9} parent=0
    _
  %s6 = ssub.s32 1, %s4
  %s7 = scalar_select 0, %s6, %s4
  // Predicated region
  $region2: #{vae_forward.9} parent=0 // pred_check
    _
  $region3: #{vae_forward.9} parent=0 // pred_check_branch
    %9 = sbr.rel (0) target = $region5
  $region4: #{vae_forward.9} parent=0 // pred_region
    _
  $region5: #{vae_forward.9} parent=0 // pred_fallthru
    _
  // Predicated region
  $region6: #{vae_forward.9} parent=0 // pred_check
    _
  $region7: #{vae_forward.9} parent=0 // pred_check_branch
    %11 = sbr.rel (0) target = $region9
  $region8: #{vae_forward.9} parent=0 // pred_region
    _
  $region9: #{vae_forward.9} parent=0 // pred_fallthru
    _
  // Predicated region
  $region10: #{vae_forward.9} parent=0 // pred_check
    _
  $region11: #{vae_forward.9} parent=0 // pred_check_branch
    %13 = sbr.rel (0) target = $region13
  $region12: #{vae_forward.9} parent=0 // pred_region
    _
  $region13: #{vae_forward.9} parent=0 // pred_fallthru
    _
  %v15 = vld [vmem:[%s0] sm:$0xff]
  %v16 = vld [vmem:[%s0 + $0x8] sm:$0xff]
  %v17 = vld [vmem:[%s0 + $0x10] sm:$0xff]
  %v18 = vld [vmem:[%s0 + $0x18] sm:$0xff]
  %v19 = vld [vmem:[%s0 + $0x20] sm:$0xff]
  %v20 = vld [vmem:[%s0 + $0x28] sm:$0xff]
  %v21 = vld [vmem:[%s0 + $0x30] sm:$0xff]
  %v22 = vld [vmem:[%s0 + $0x38] sm:$0xff]
  %v23 = vld [vmem:[%s0 + $0x40] sm:$0xff]
  %v24 = vld [vmem:[%s0 + $0x48] sm:$0xff]
  %v25 = vld [vmem:[%s0 + $0x50] sm:$0xff]
  %v26 = vld [vmem:[%s0 + $0x58] sm:$0xff]
  %v27 = vld [vmem:[%s0 + $0x60] sm:$0xff]
  %v28 = vld [vmem:[%s0 + $0x68] sm:$0xff]
  %v29 = vld [vmem:[%s0 + $0x70] sm:$0xff]
  %v30 = vld [vmem:[%s0 + $0x78] sm:$0xff]
  %v31 = vld [vmem:[%s0 + $0x80] sm:$0xff]
  %v32 = vld [vmem:[%s0 + $0x88] sm:$0xff]
  %v33 = vld [vmem:[%s0 + $0x90] sm:$0xff]
  %v34 = vld [vmem:[%s0 + $0x98] sm:$0xff]
  %v35 = vld [vmem:[%s0 + $0xa0] sm:$0xff]
  %v36 = vld [vmem:[%s0 + $0xa8] sm:$0xff]
  %v37 = vld [vmem:[%s0 + $0xb0] sm:$0xff]
  %v38 = vld [vmem:[%s0 + $0xb8] sm:$0xff]
  %v39 = vld [vmem:[%s1] sm:$0xf]
  %v40 = vld [vmem:[%s1 + $0x4] sm:$0xf]
  %v41 = vld [vmem:[%s1 + $0x8] sm:$0xf]
  %v42 = vld [vmem:[%s1 + $0xc] sm:$0xf]
  %v43 = vld [vmem:[%s1 + $0x10] sm:$0xf]
  %v44 = vld [vmem:[%s1 + $0x14] sm:$0xf]
  %v45 = vld [vmem:[%s1 + $0x18] sm:$0xf]
  %v46 = vld [vmem:[%s1 + $0x1c] sm:$0xf]
  %v47 = vld [vmem:[%s1 + $0x20] sm:$0xf]
  %v48 = vld [vmem:[%s1 + $0x24] sm:$0xf]
  %v49 = vld [vmem:[%s1 + $0x28] sm:$0xf]
  %v50 = vld [vmem:[%s1 + $0x2c] sm:$0xf]
  %v51 = vld [vmem:[%s1 + $0x30] sm:$0xf]
  %v52 = vld [vmem:[%s1 + $0x34] sm:$0xf]
  %v53 = vld [vmem:[%s1 + $0x38] sm:$0xf]
  %v54 = vld [vmem:[%s1 + $0x3c] sm:$0xf]
  %v55 = vld [vmem:[%s1 + $0x40] sm:$0xf]
  %v56 = vld [vmem:[%s1 + $0x44] sm:$0xf]
  %v57 = vld [vmem:[%s1 + $0x48] sm:$0xf]
  %v58 = vld [vmem:[%s1 + $0x4c] sm:$0xf]
  %v59 = vld [vmem:[%s1 + $0x50] sm:$0xf]
  %v60 = vld [vmem:[%s1 + $0x54] sm:$0xf]
  %v61 = vld [vmem:[%s1 + $0x58] sm:$0xf]
  %v62 = vld [vmem:[%s1 + $0x5c] sm:$0xf]
  %v63 = vld [vmem:[%s1 + $0x60] sm:$0xf]
  %v64 = vld [vmem:[%s1 + $0x64] sm:$0xf]
  %v65 = vld [vmem:[%s1 + $0x68] sm:$0xf]
  %v66 = vld [vmem:[%s1 + $0x6c] sm:$0xf]
  %v67 = vld [vmem:[%s1 + $0x70] sm:$0xf]
  %v68 = vld [vmem:[%s1 + $0x74] sm:$0xf]
  %v69 = vld [vmem:[%s1 + $0x78] sm:$0xf]
  %v70 = vld [vmem:[%s1 + $0x7c] sm:$0xf]
  %v71 = vld [vmem:[%s1 + $0x80] sm:$0xf]
  %v72 = vld [vmem:[%s1 + $0x84] sm:$0xf]
  %v73 = vld [vmem:[%s1 + $0x88] sm:$0xf]
  %v74 = vld [vmem:[%s1 + $0x8c] sm:$0xf]
  %v75 = vld [vmem:[%s1 + $0x90] sm:$0xf]
  %v76 = vld [vmem:[%s1 + $0x94] sm:$0xf]
  %v77 = vld [vmem:[%s1 + $0x98] sm:$0xf]
  %v78 = vld [vmem:[%s1 + $0x9c] sm:$0xf]
  %v79 = vld [vmem:[%s1 + $0xa0] sm:$0xf]
  %v80 = vld [vmem:[%s1 + $0xa4] sm:$0xf]
  %v81 = vld [vmem:[%s1 + $0xa8] sm:$0xf]
  %v82 = vld [vmem:[%s1 + $0xac] sm:$0xf]
  %v83 = vld [vmem:[%s1 + $0xb0] sm:$0xf]
  %v84 = vld [vmem:[%s1 + $0xb4] sm:$0xf]
  %v85 = vld [vmem:[%s1 + $0xb8] sm:$0xf]
  %v86 = vld [vmem:[%s1 + $0xbc] sm:$0xf]
  %v87 = vld [vmem:[%s1 + $0xc0] sm:$0xf]
  %v88 = vld [vmem:[%s1 + $0xc4] sm:$0xf]
  %v89 = vld [vmem:[%s1 + $0xc8] sm:$0xf]
  %v90 = vld [vmem:[%s1 + $0xcc] sm:$0xf]
  %v91 = vld [vmem:[%s1 + $0xd0] sm:$0xf]
  %v92 = vld [vmem:[%s1 + $0xd4] sm:$0xf]
  %v93 = vld [vmem:[%s2] sm:$0xff]
  %v94 = vld [vmem:[%s2 + $0x8] sm:$0xff]
  %v95 = vld [vmem:[%s2 + $0x10] sm:$0xff]
  %v96 = vld [vmem:[%s2 + $0x18] sm:$0xff]
  %v97 = vld [vmem:[%s2 + $0x20] sm:$0xff]
  %v98 = vld [vmem:[%s2 + $0x28] sm:$0xff]
  %v99 = vld [vmem:[%s2 + $0x30] sm:$0xff]
  %v100 = vld [vmem:[%s2 + $0x38] sm:$0xff]
  %v101 = vld [vmem:[%s2 + $0x40] sm:$0xff]
  %v102 = vld [vmem:[%s2 + $0x48] sm:$0xff]
  %v103 = vld [vmem:[%s2 + $0x50] sm:$0xff]
  %v104 = vld [vmem:[%s2 + $0x58] sm:$0xff]
  %106 = vset.pattern.permute.xlu0 0
  %107 = vperm.xlu0 %106, %v93
  %v108 = vpop.permute.xlu0 %107
  %111 = vset.pattern.permute.xlu0 0
  %112 = vperm.xlu0 %111, %v94
  %v113 = vpop.permute.xlu0 %112
  %116 = vset.pattern.permute.xlu0 0
  %117 = vperm.xlu0 %116, %v95
  %v118 = vpop.permute.xlu0 %117
  %121 = vset.pattern.permute.xlu0 0
  %122 = vperm.xlu0 %121, %v96
  %v123 = vpop.permute.xlu0 %122
  %126 = vset.pattern.permute.xlu0 0
  %127 = vperm.xlu0 %126, %v97
  %v128 = vpop.permute.xlu0 %127
  %131 = vset.pattern.permute.xlu0 0
  %132 = vperm.xlu0 %131, %v98
  %v133 = vpop.permute.xlu0 %132
  %136 = vset.pattern.permute.xlu0 0
  %137 = vperm.xlu0 %136, %v99
  %v138 = vpop.permute.xlu0 %137
  %141 = vset.pattern.permute.xlu0 0
  %142 = vperm.xlu0 %141, %v100
  %v143 = vpop.permute.xlu0 %142
  %146 = vset.pattern.permute.xlu0 0
  %147 = vperm.xlu0 %146, %v101
  %v148 = vpop.permute.xlu0 %147
  %151 = vset.pattern.permute.xlu0 0
  %152 = vperm.xlu0 %151, %v102
  %v153 = vpop.permute.xlu0 %152
  %156 = vset.pattern.permute.xlu0 0
  %157 = vperm.xlu0 %156, %v103
  %v158 = vpop.permute.xlu0 %157
  %161 = vset.pattern.permute.xlu0 0
  %162 = vperm.xlu0 %161, %v104
  %v163 = vpop.permute.xlu0 %162
  %v189 = vunpack.c.l.b16 %v15
  %v190 = vunpack.c.h.b16 %v15
  %v191 = vunpack.c.l.b16 %v16
  %v192 = vunpack.c.h.b16 %v16
  %v193 = vunpack.c.l.b16 %v17
  %v194 = vunpack.c.h.b16 %v17
  %v195 = vunpack.c.l.b16 %v18
  %v196 = vunpack.c.h.b16 %v18
  %v197 = vunpack.c.l.b16 %v19
  %v198 = vunpack.c.h.b16 %v19
  %v199 = vunpack.c.l.b16 %v20
  %v200 = vunpack.c.h.b16 %v20
  %v201 = vunpack.c.l.b16 %v21
  %v202 = vunpack.c.h.b16 %v21
  %v203 = vunpack.c.l.b16 %v22
  %v204 = vunpack.c.h.b16 %v22
  %v205 = vunpack.c.l.b16 %v23
  %v206 = vunpack.c.h.b16 %v23
  %v207 = vunpack.c.l.b16 %v24
  %v208 = vunpack.c.h.b16 %v24
  %v209 = vunpack.c.l.b16 %v25
  %v210 = vunpack.c.h.b16 %v25
  %v211 = vunpack.c.l.b16 %v26
  %v212 = vunpack.c.h.b16 %v26
  %v213 = vunpack.c.l.b16 %v27
  %v214 = vunpack.c.h.b16 %v27
  %v215 = vunpack.c.l.b16 %v28
  %v216 = vunpack.c.h.b16 %v28
  %v217 = vunpack.c.l.b16 %v29
  %v218 = vunpack.c.h.b16 %v29
  %v219 = vunpack.c.l.b16 %v30
  %v220 = vunpack.c.h.b16 %v30
  %v221 = vunpack.c.l.b16 %v31
  %v222 = vunpack.c.h.b16 %v31
  %v223 = vunpack.c.l.b16 %v32
  %v224 = vunpack.c.h.b16 %v32
  %v225 = vunpack.c.l.b16 %v33
  %v226 = vunpack.c.h.b16 %v33
  %v227 = vunpack.c.l.b16 %v34
  %v228 = vunpack.c.h.b16 %v34
  %v229 = vunpack.c.l.b16 %v35
  %v230 = vunpack.c.h.b16 %v35
  %v231 = vunpack.c.l.b16 %v36
  %v232 = vunpack.c.h.b16 %v36
  %v233 = vunpack.c.l.b16 %v37
  %v234 = vunpack.c.h.b16 %v37
  %v235 = vunpack.c.l.b16 %v38
  %v236 = vunpack.c.h.b16 %v38
  %v237 = vpack.c.b16 %v193, %v189
  %v238 = vpack.c.b16 %v194, %v190
  %v239 = vpack.c.b16 %v195, %v191
  %v240 = vpack.c.b16 %v196, %v192
  %v241 = vpack.c.b16 %v201, %v197
  %v242 = vpack.c.b16 %v202, %v198
  %v243 = vpack.c.b16 %v203, %v199
  %v244 = vpack.c.b16 %v204, %v200
  %v245 = vpack.c.b16 %v209, %v205
  %v246 = vpack.c.b16 %v210, %v206
  %v247 = vpack.c.b16 %v211, %v207
  %v248 = vpack.c.b16 %v212, %v208
  %v249 = vpack.c.b16 %v217, %v213
  %v250 = vpack.c.b16 %v218, %v214
  %v251 = vpack.c.b16 %v219, %v215
  %v252 = vpack.c.b16 %v220, %v216
  %v253 = vpack.c.b16 %v225, %v221
  %v254 = vpack.c.b16 %v226, %v222
  %v255 = vpack.c.b16 %v227, %v223
  %v256 = vpack.c.b16 %v228, %v224
  %v257 = vpack.c.b16 %v233, %v229
  %v258 = vpack.c.b16 %v234, %v230
  %v259 = vpack.c.b16 %v235, %v231
  %v260 = vpack.c.b16 %v236, %v232
  %v333 = vunpack.c.l.b16 %v39
  %v334 = vunpack.c.l.b16 %v40
  %v335 = vunpack.c.l.b16 %v41
  %v336 = vunpack.c.l.b16 %v42
  %v337 = vunpack.c.l.b16 %v43
  %v338 = vunpack.c.l.b16 %v44
  %v339 = vunpack.c.l.b16 %v45
  %v340 = vunpack.c.l.b16 %v46
  %v341 = vunpack.c.l.b16 %v47
  %v342 = vunpack.c.l.b16 %v48
  %v343 = vunpack.c.l.b16 %v49
  %v344 = vunpack.c.l.b16 %v50
  %v345 = vunpack.c.l.b16 %v51
  %v346 = vunpack.c.l.b16 %v52
  %v347 = vunpack.c.l.b16 %v53
  %v348 = vunpack.c.l.b16 %v54
  %v349 = vunpack.c.l.b16 %v55
  %v350 = vunpack.c.l.b16 %v56
  %v351 = vunpack.c.l.b16 %v57
  %v352 = vunpack.c.l.b16 %v58
  %v353 = vunpack.c.l.b16 %v59
  %v354 = vunpack.c.l.b16 %v60
  %v355 = vunpack.c.l.b16 %v61
  %v356 = vunpack.c.l.b16 %v62
  %v357 = vunpack.c.l.b16 %v63
  %v358 = vunpack.c.l.b16 %v64
  %v359 = vunpack.c.l.b16 %v65
  %v360 = vunpack.c.l.b16 %v66
  %v361 = vunpack.c.l.b16 %v67
  %v362 = vunpack.c.l.b16 %v68
  %v363 = vunpack.c.l.b16 %v69
  %v364 = vunpack.c.l.b16 %v70
  %v365 = vunpack.c.l.b16 %v71
  %v366 = vunpack.c.l.b16 %v72
  %v367 = vunpack.c.l.b16 %v73
  %v368 = vunpack.c.l.b16 %v74
  %v369 = vunpack.c.l.b16 %v75
  %v370 = vunpack.c.l.b16 %v76
  %v371 = vunpack.c.l.b16 %v77
  %v372 = vunpack.c.l.b16 %v78
  %v373 = vunpack.c.l.b16 %v79
  %v374 = vunpack.c.l.b16 %v80
  %v375 = vunpack.c.l.b16 %v81
  %v376 = vunpack.c.l.b16 %v82
  %v377 = vunpack.c.l.b16 %v83
  %v378 = vunpack.c.l.b16 %v84
  %v379 = vunpack.c.l.b16 %v85
  %v380 = vunpack.c.l.b16 %v86
  %v381 = vunpack.c.l.b16 %v87
  %v382 = vunpack.c.l.b16 %v88
  %v383 = vunpack.c.l.b16 %v89
  %v384 = vunpack.c.l.b16 %v90
  %v385 = vunpack.c.l.b16 %v91
  %v386 = vunpack.c.l.b16 %v92
  %v387 = vpack.c.b16 %v334, %v333
  %v388 = vpack.c.b16 %v336, %v335
  %v389 = vpack.c.b16 %v338, %v337
  %v390 = vpack.c.b16 %v340, %v339
  %v391 = vpack.c.b16 %v342, %v341
  %v392 = vpack.c.b16 %v344, %v343
  %v393 = vpack.c.b16 %v346, %v345
  %v394 = vpack.c.b16 %v348, %v347
  %v395 = vpack.c.b16 %v350, %v349
  %v396 = vpack.c.b16 %v352, %v351
  %v397 = vpack.c.b16 %v354, %v353
  %v398 = vpack.c.b16 %v356, %v355
  %v399 = vpack.c.b16 %v358, %v357
  %v400 = vpack.c.b16 %v360, %v359
  %v401 = vpack.c.b16 %v362, %v361
  %v402 = vpack.c.b16 %v364, %v363
  %v403 = vpack.c.b16 %v366, %v365
  %v404 = vpack.c.b16 %v368, %v367
  %v405 = vpack.c.b16 %v370, %v369
  %v406 = vpack.c.b16 %v372, %v371
  %v407 = vpack.c.b16 %v374, %v373
  %v408 = vpack.c.b16 %v376, %v375
  %v409 = vpack.c.b16 %v378, %v377
  %v410 = vpack.c.b16 %v380, %v379
  %v411 = vpack.c.b16 %v382, %v381
  %v412 = vpack.c.b16 %v384, %v383
  %v413 = vpack.c.b16 %v386, %v385
  %vm441 = vcmask 392192
  %v443 = vsel %vm441, %v240, 0
  %v446 = vsel %vm441, %v244, 0
  %v449 = vsel %vm441, %v248, 0
  %v452 = vsel %vm441, %v252, 0
  %v455 = vsel %vm441, %v256, 0
  %v458 = vsel %vm441, %v260, 0
  %460 = vmatprep.subr.bf16.mxu0 0
  %461 = vmatpush1.bf16.msra.mxu0 %v387
  %462 = vmatprep.subr.bf16.mxu0 0
  %463 = vmatpush1.bf16.msra.mxu0 %v388
  %464 = vmatprep.subr.bf16.mxu0 0
  %465 = vmatpush1.bf16.msra.mxu0 %v389
  %466 = vmatprep.subr.bf16.mxu0 0
  %467 = vmatpush1.bf16.msra.mxu0 %v390
  %468 = vmatprep.subr.bf16.mxu0 0
  %469 = vmatpush1.bf16.msra.mxu0 %v391
  %470 = vmatprep.subr.bf16.mxu0 0
  %471 = vmatpush1.bf16.msra.mxu0 %v392
  %472 = vmatprep.subr.bf16.mxu0 0
  %473 = vmatpush1.bf16.msra.mxu0 %v393
  %474 = vmatprep.subr.bf16.mxu0 0
  %475 = vmatpush1.bf16.msra.mxu0 %v394
  %476 = vmatprep.subr.bf16.mxu0 0
  %477 = vmatpush1.bf16.msra.mxu0 %v395
  %478 = vmatprep.subr.bf16.mxu0 0
  %479 = vmatpush1.bf16.msra.mxu0 %v396
  %480 = vmatprep.subr.bf16.mxu0 0
  %481 = vmatpush1.bf16.msra.mxu0 %v397
  %482 = vmatprep.subr.bf16.mxu0 0
  %483 = vmatpush1.bf16.msra.mxu0 %v398
  %484 = vmatprep.subr.bf16.mxu0 0
  %485 = vmatpush1.bf16.msra.mxu0 %v399
  %486 = vmatprep.subr.bf16.mxu0 0
  %487 = vmatpush1.bf16.msra.mxu0 %v400
  %488 = vmatprep.subr.bf16.mxu0 0
  %489 = vmatpush1.bf16.msra.mxu0 %v401
  %490 = vmatprep.subr.bf16.mxu0 0
  %491 = vmatpush1.bf16.msra.mxu0 %v402
  %492 = vmatprep.mubr.bf16.mxu0 %v238
  %493 = vmatmul.mubr.bf16.gmra.mrb[0].mxu0 %v237
  %v494 = vpop.f32.mrb[0].mxu0
  %v495 = vadd.f32 %v108, %v494
  %v496 = vpop.f32.mrb[0].mxu0
  %v497 = vpop.f32.mrb[0].mxu0
  %v498 = vadd.f32 %v113, %v497
  %v499 = vpop.f32.mrb[0].mxu0
  %500 = vmatprep.mubr.bf16.mxu0 %v242
  %501 = vmatmul.mubr.bf16.gmra.mrb[0].mxu0 %v241
  %v502 = vpop.f32.mrb[0].mxu0
  %v503 = vadd.f32 %v118, %v502
  %v504 = vpop.f32.mrb[0].mxu0
  %v505 = vpop.f32.mrb[0].mxu0
  %v506 = vadd.f32 %v123, %v505
  %v507 = vpop.f32.mrb[0].mxu0
  %508 = vmatprep.mubr.bf16.mxu0 %v246
  %509 = vmatmul.mubr.bf16.gmra.mrb[0].mxu0 %v245
  %v510 = vpop.f32.mrb[0].mxu0
  %v511 = vadd.f32 %v128, %v510
  %v512 = vpop.f32.mrb[0].mxu0
  %v513 = vpop.f32.mrb[0].mxu0
  %v514 = vadd.f32 %v133, %v513
  %v515 = vpop.f32.mrb[0].mxu0
  %516 = vmatprep.mubr.bf16.mxu0 %v250
  %517 = vmatmul.mubr.bf16.gmra.mrb[0].mxu0 %v249
  %v518 = vpop.f32.mrb[0].mxu0
  %v519 = vadd.f32 %v138, %v518
  %v520 = vpop.f32.mrb[0].mxu0
  %v521 = vpop.f32.mrb[0].mxu0
  %v522 = vadd.f32 %v143, %v521
  %v523 = vpop.f32.mrb[0].mxu0
  %524 = vmatprep.mubr.bf16.mxu0 %v254
  %525 = vmatmul.mubr.bf16.gmra.mrb[0].mxu0 %v253
  %v526 = vpop.f32.mrb[0].mxu0
  %v527 = vadd.f32 %v148, %v526
  %v528 = vpop.f32.mrb[0].mxu0
  %v529 = vpop.f32.mrb[0].mxu0
  %v530 = vadd.f32 %v153, %v529
  %v531 = vpop.f32.mrb[0].mxu0
  %532 = vmatprep.mubr.bf16.mxu0 %v258
  %533 = vmatmul.mubr.bf16.gmra.mrb[0].mxu0 %v257
  %v534 = vpop.f32.mrb[0].mxu0
  %v535 = vadd.f32 %v158, %v534
  %v536 = vpop.f32.mrb[0].mxu0
  %v537 = vpop.f32.mrb[0].mxu0
  %v538 = vadd.f32 %v163, %v537
  %v539 = vpop.f32.mrb[0].mxu0
  %540 = vdwg.mxu0
  %541 = vmatprep.subr.bf16.mxu0 0
  %542 = vmatpush1.bf16.msra.mxu0 %v403
  %543 = vmatprep.subr.bf16.mxu0 0
  %544 = vmatpush1.bf16.msra.mxu0 %v404
  %545 = vmatprep.subr.bf16.mxu0 0
  %546 = vmatpush1.bf16.msra.mxu0 %v405
  %547 = vmatprep.subr.bf16.mxu0 0
  %548 = vmatpush1.bf16.msra.mxu0 %v406
  %549 = vmatprep.subr.bf16.mxu0 0
  %550 = vmatpush1.bf16.msra.mxu0 %v407
  %551 = vmatprep.subr.bf16.mxu0 0
  %552 = vmatpush1.bf16.msra.mxu0 %v408
  %553 = vmatprep.subr.bf16.mxu0 0
  %554 = vmatpush1.bf16.msra.mxu0 %v409
  %555 = vmatprep.subr.bf16.mxu0 0
  %556 = vmatpush1.bf16.msra.mxu0 %v410
  %557 = vmatprep.subr.bf16.mxu0 0
  %558 = vmatpush1.bf16.msra.mxu0 %v411
  %559 = vmatprep.subr.bf16.mxu0 0
  %560 = vmatpush1.bf16.msra.mxu0 %v412
  %561 = vmatprep.subr.bf16.mxu0 0
  %562 = vmatpush1.bf16.msra.mxu0 %v413
  %563 = vmatprep.subr.bf16.mxu0 0
  %564 = vmatpush1.bf16.msra.mxu0 0
  %565 = vmatprep.subr.bf16.mxu0 0
  %566 = vmatpush1.bf16.msra.mxu0 0
  %567 = vmatprep.subr.bf16.mxu0 0
  %568 = vmatpush1.bf16.msra.mxu0 0
  %569 = vmatprep.subr.bf16.mxu0 0
  %570 = vmatpush1.bf16.msra.mxu0 0
  %571 = vmatprep.subr.bf16.mxu0 0
  %572 = vmatpush1.bf16.msra.mxu0 0
  %573 = vmatprep.mubr.bf16.mxu0 %v443
  %574 = vmatmul.mubr.bf16.gmra.mrb[0].mxu0 %v239
  %v575 = vpop.f32.mrb[0].mxu0
  %v576 = vadd.f32 %v495, %v575
  %v577 = vpop.f32.mrb[0].mxu0
  %v578 = vpop.f32.mrb[0].mxu0
  %v579 = vadd.f32 %v498, %v578
  %v580 = vpop.f32.mrb[0].mxu0
  %581 = vmatprep.mubr.bf16.mxu0 %v446
  %582 = vmatmul.mubr.bf16.gmra.mrb[0].mxu0 %v243
  %v583 = vpop.f32.mrb[0].mxu0
  %v584 = vadd.f32 %v503, %v583
  %v585 = vpop.f32.mrb[0].mxu0
  %v586 = vpop.f32.mrb[0].mxu0
  %v587 = vadd.f32 %v506, %v586
  %v588 = vpop.f32.mrb[0].mxu0
  %589 = vmatprep.mubr.bf16.mxu0 %v449
  %590 = vmatmul.mubr.bf16.gmra.mrb[0].mxu0 %v247
  %v591 = vpop.f32.mrb[0].mxu0
  %v592 = vadd.f32 %v511, %v591
  %v593 = vpop.f32.mrb[0].mxu0
  %v594 = vpop.f32.mrb[0].mxu0
  %v595 = vadd.f32 %v514, %v594
  %v596 = vpop.f32.mrb[0].mxu0
  %597 = vmatprep.mubr.bf16.mxu0 %v452
  %598 = vmatmul.mubr.bf16.gmra.mrb[0].mxu0 %v251
  %v599 = vpop.f32.mrb[0].mxu0
  %v600 = vadd.f32 %v519, %v599
  %v601 = vpop.f32.mrb[0].mxu0
  %v602 = vpop.f32.mrb[0].mxu0
  %v603 = vadd.f32 %v522, %v602
  %v604 = vpop.f32.mrb[0].mxu0
  %605 = vmatprep.mubr.bf16.mxu0 %v455
  %606 = vmatmul.mubr.bf16.gmra.mrb[0].mxu0 %v255
  %v607 = vpop.f32.mrb[0].mxu0
  %v608 = vadd.f32 %v527, %v607
  %v609 = vpop.f32.mrb[0].mxu0
  %v610 = vpop.f32.mrb[0].mxu0
  %v611 = vadd.f32 %v530, %v610
  %v612 = vpop.f32.mrb[0].mxu0
  %613 = vmatprep.mubr.bf16.mxu0 %v458
  %614 = vmatmul.mubr.bf16.gmra.mrb[0].mxu0 %v259
  %v615 = vpop.f32.mrb[0].mxu0
  %v616 = vadd.f32 %v535, %v615
  %v617 = vpop.f32.mrb[0].mxu0
  %v618 = vpop.f32.mrb[0].mxu0
  %v619 = vadd.f32 %v538, %v618
  %v620 = vpop.f32.mrb[0].mxu0
  %621 = vdwg.mxu0
  %v622 = vmax.f32 %v576, 0.0
  %v623 = vmax.f32 %v579, 0.0
  %v624 = vmax.f32 %v584, 0.0
  %v625 = vmax.f32 %v587, 0.0
  %v626 = vmax.f32 %v592, 0.0
  %v627 = vmax.f32 %v595, 0.0
  %v628 = vmax.f32 %v600, 0.0
  %v629 = vmax.f32 %v603, 0.0
  %v630 = vmax.f32 %v608, 0.0
  %v631 = vmax.f32 %v611, 0.0
  %v632 = vmax.f32 %v616, 0.0
  %v633 = vmax.f32 %v619, 0.0
  %vm634 = vcmask 64512
  %635 = vst.msk [vmem:[%s3] sm:$0xff] %vm634, %v622
  %636 = vst.msk [vmem:[%s3 + $0x8] sm:$0xff] %vm634, %v623
  %637 = vst.msk [vmem:[%s3 + $0x10] sm:$0xff] %vm634, %v624
  %638 = vst.msk [vmem:[%s3 + $0x18] sm:$0xff] %vm634, %v625
  %639 = vst.msk [vmem:[%s3 + $0x20] sm:$0xff] %vm634, %v626
  %640 = vst.msk [vmem:[%s3 + $0x28] sm:$0xff] %vm634, %v627
  %641 = vst.msk [vmem:[%s3 + $0x30] sm:$0xff] %vm634, %v628
  %642 = vst.msk [vmem:[%s3 + $0x38] sm:$0xff] %vm634, %v629
  %643 = vst.msk [vmem:[%s3 + $0x40] sm:$0xff] %vm634, %v630
  %644 = vst.msk [vmem:[%s3 + $0x48] sm:$0xff] %vm634, %v631
  %645 = vst.msk [vmem:[%s3 + $0x50] sm:$0xff] %vm634, %v632
  %646 = vst.msk [vmem:[%s3 + $0x58] sm:$0xff] %vm634, %v633
  // Predicated region
  $region14: #{vae_forward.9} parent=0 // pred_check
    _
  $region15: #{vae_forward.9} parent=0 // pred_check_branch
    %648 = sbr.rel (0) target = $region17
  $region16: #{vae_forward.9} parent=0 // pred_region
    _
  $region17: #{vae_forward.9} parent=0 // pred_fallthru
    _
  // Predicated region
  $region18: #{vae_forward.9} parent=0 // pred_check
    _
  $region19: #{vae_forward.9} parent=0 // pred_check_branch
    %650 = sbr.rel (0) target = $region21
  $region20: #{vae_forward.9} parent=0 // pred_region
    _
  $region21: #{vae_forward.9} parent=0 // pred_fallthru
    _

// kernel: tile.23
$region0: #{tile.23}
  #allocation0 [shape = 's32[1]{0}', space=sflag, size = 0x4, scoped, tag = 'scoped memory for tile.23']
  %s0 = inlined_call_operand.vmem [shape: f32[12], index: 0, kind: input, shape index: {}]
  %s1 = inlined_call_operand.vmem [shape: f32[4,12], index: 1, kind: output, shape index: {}]
  // Predicated region
  $region2: #{tile.23} parent=0 // pred_check
    _
  $region3: #{tile.23} parent=0 // pred_check_branch
    %3 = sbr.rel (0) target = $region5
  $region4: #{tile.23} parent=0 // pred_region
    _
  $region5: #{tile.23} parent=0 // pred_fallthru
    _
  %v4 = vld [vmem:[%s0] ss:$0 sm:$0xff]
  %5 = vst [vmem:[%s1] sm:$0xf] %v4

// kernel: tile.1
$region0: #{tile.1}
  %s0 = inlined_call_operand.vmem [shape: f32[4,12], index: 0, kind: input, shape index: {}]
  %s1 = inlined_call_operand.vmem [shape: f32[48,1], index: 1, kind: output, shape index: {}]
  $region1: #{tile.1} parent=0
    #allocation0 [shape = 'u8[4096]{0}', space=vmem, size = 0x1000, scoped, tag = 'scoped mem for input reshape']
    %s3 = sshllo.u32 0, 4
    %v4 = vld [vmem:[%s0] sm:%s3]
    %5 = vst [vmem:[#allocation0] sm:%s3] %v4
    %v6 = vld [vmem:[#allocation0] sm:$0xf]
    %vm7 = vcmask 7168
    %8 = vst.msk [vmem:[%s1] ss:$12 sm:$0xf] %vm7, %v6
    %v9 = vld.sshfl [vmem:[#allocation0] sm:$0xff pattern:$0x22222130]
    %10 = vrot.lane.b32.xlu0 %v9, 127
    %v11 = vpop.permute.xlu0 %10
    %vm12 = vcmask 7168
    %s13 = scalar_lea.vmem %s1, 1
    %14 = vst.msk [vmem:[%s13] ss:$36 sm:$0x3] %vm12, %v11
    %s15 = scalar_lea.vmem %s1, 4294967285
    %16 = vst.msk [vmem:[%s15] ss:$12 sm:$0xc] %vm12, %v11
    %v17 = vld.sshfl [vmem:[#allocation0] sm:$0xff pattern:$0x22222130]
    %18 = vrot.lane.b32.xlu0 %v17, 126
    %v19 = vpop.permute.xlu0 %18
    %vm20 = vcmask 7168
    %s21 = scalar_lea.vmem %s1, 2
    %22 = vst.msk [vmem:[%s21] ss:$36 sm:$0x3] %vm20, %v19
    %s23 = scalar_lea.vmem %s1, 4294967286
    %24 = vst.msk [vmem:[%s23] ss:$12 sm:$0xc] %vm20, %v19
    %v25 = vld.sshfl [vmem:[#allocation0] sm:$0xff pattern:$0x22222130]
    %26 = vrot.lane.b32.xlu0 %v25, 125
    %v27 = vpop.permute.xlu0 %26
    %vm28 = vcmask 7168
    %s29 = scalar_lea.vmem %s1, 3
    %30 = vst.msk [vmem:[%s29] ss:$36 sm:$0x3] %vm28, %v27
    %s31 = scalar_lea.vmem %s1, 4294967287
    %32 = vst.msk [vmem:[%s31] ss:$12 sm:$0xc] %vm28, %v27
    %v33 = vld.sshfl [vmem:[#allocation0] sm:$0xff pattern:$0x22222130]
    %34 = vrot.lane.b32.xlu0 %v33, 124
    %v35 = vpop.permute.xlu0 %34
    %vm36 = vcmask 7168
    %s37 = scalar_lea.vmem %s1, 4
    %38 = vst.msk [vmem:[%s37] ss:$36 sm:$0x3] %vm36, %v35
    %s39 = scalar_lea.vmem %s1, 4294967288
    %40 = vst.msk [vmem:[%s39] ss:$12 sm:$0xc] %vm36, %v35
    %v41 = vld.sshfl [vmem:[#allocation0] sm:$0xff pattern:$0x22222130]
    %42 = vrot.lane.b32.xlu0 %v41, 123
    %v43 = vpop.permute.xlu0 %42
    %vm44 = vcmask 7168
    %s45 = scalar_lea.vmem %s1, 5
    %46 = vst.msk [vmem:[%s45] ss:$36 sm:$0x3] %vm44, %v43
    %s47 = scalar_lea.vmem %s1, 4294967289
    %48 = vst.msk [vmem:[%s47] ss:$12 sm:$0xc] %vm44, %v43
    %v49 = vld.sshfl [vmem:[#allocation0] sm:$0xff pattern:$0x22222130]
    %50 = vrot.lane.b32.xlu0 %v49, 122
    %v51 = vpop.permute.xlu0 %50
    %vm52 = vcmask 7168
    %s53 = scalar_lea.vmem %s1, 6
    %54 = vst.msk [vmem:[%s53] ss:$36 sm:$0x3] %vm52, %v51
    %s55 = scalar_lea.vmem %s1, 4294967290
    %56 = vst.msk [vmem:[%s55] ss:$12 sm:$0xc] %vm52, %v51
    %v57 = vld.sshfl [vmem:[#allocation0] sm:$0xff pattern:$0x22222130]
    %58 = vrot.lane.b32.xlu0 %v57, 121
    %v59 = vpop.permute.xlu0 %58
    %vm60 = vcmask 7168
    %s61 = scalar_lea.vmem %s1, 7
    %62 = vst.msk [vmem:[%s61] ss:$36 sm:$0x3] %vm60, %v59
    %s63 = scalar_lea.vmem %s1, 4294967291
    %64 = vst.msk [vmem:[%s63] ss:$12 sm:$0xc] %vm60, %v59
    %v65 = vld.sshfl [vmem:[#allocation0] sm:$0xff pattern:$0x11111302]
    %66 = vrot.lane.b32.xlu0 %v65, 120
    %v67 = vpop.permute.xlu0 %66
    %vm68 = vcmask 7168
    %s69 = scalar_lea.vmem %s1, 32
    %70 = vst.msk [vmem:[%s69] ss:$-24 sm:$0x3] %vm68, %v67
    %s71 = scalar_lea.vmem %s1, 92
    %72 = vst.msk [vmem:[%s71] ss:$-24 sm:$0xc] %vm68, %v67
    %v73 = vld.sshfl [vmem:[#allocation0] sm:$0xff pattern:$0x11111302]
    %74 = vrot.lane.b32.xlu0 %v73, 119
    %v75 = vpop.permute.xlu0 %74
    %vm76 = vcmask 7168
    %s77 = scalar_lea.vmem %s1, 33
    %78 = vst.msk [vmem:[%s77] ss:$-24 sm:$0x3] %vm76, %v75
    %s79 = scalar_lea.vmem %s1, 93
    %80 = vst.msk [vmem:[%s79] ss:$-24 sm:$0xc] %vm76, %v75
    %v81 = vld.sshfl [vmem:[#allocation0] sm:$0xff pattern:$0x11111302]
    %82 = vrot.lane.b32.xlu0 %v81, 118
    %v83 = vpop.permute.xlu0 %82
    %vm84 = vcmask 7168
    %s85 = scalar_lea.vmem %s1, 34
    %86 = vst.msk [vmem:[%s85] ss:$-24 sm:$0x3] %vm84, %v83
    %s87 = scalar_lea.vmem %s1, 94
    %88 = vst.msk [vmem:[%s87] ss:$-24 sm:$0xc] %vm84, %v83
    %v89 = vld.sshfl [vmem:[#allocation0] sm:$0xff pattern:$0x11111302]
    %90 = vrot.lane.b32.xlu0 %v89, 117
    %v91 = vpop.permute.xlu0 %90
    %vm92 = vcmask 7168
    %s93 = scalar_lea.vmem %s1, 35
    %94 = vst.msk [vmem:[%s93] ss:$-24 sm:$0x3] %vm92, %v91
    %s95 = scalar_lea.vmem %s1, 95
    %96 = vst.msk [vmem:[%s95] ss:$-24 sm:$0xc] %vm92, %v91

// kernel: vae_forward.10
$region0: #{vae_forward.10}
  #allocation0 [shape = 'u32[]', space=smem, size = 0x4, offset = 0x4, fixed_abs, tag = 'smem constant byte address 0x4 - core index']
  #allocation1 [shape = 'u32[144,128]{1,0:T(1,128)}', space=vmem, size = 0x12000, scoped, tag = 'internal scratch']
  %s0 = inlined_call_operand.vmem [shape: bf16[48,216], index: 0, kind: input, shape index: {}]
  %s1 = inlined_call_operand.vmem [shape: bf16[216,32], index: 1, kind: input, shape index: {}]
  %s2 = inlined_call_operand.vmem [shape: f32[48,1], index: 2, kind: input, shape index: {}]
  %s3 = inlined_call_operand.vmem [shape: f32[48,32], index: 3, kind: output, shape index: {}]
  %s4 = sld [smem:[#allocation0]]
  $region22: #{vae_forward.10} parent=0
    _
  %s6 = ssub.s32 1, %s4
  %s7 = scalar_select 0, %s6, %s4
  // Predicated region
  $region2: #{vae_forward.10} parent=0 // pred_check
    _
  $region3: #{vae_forward.10} parent=0 // pred_check_branch
    %9 = sbr.rel (0) target = $region5
  $region4: #{vae_forward.10} parent=0 // pred_region
    _
  $region5: #{vae_forward.10} parent=0 // pred_fallthru
    _
  // Predicated region
  $region6: #{vae_forward.10} parent=0 // pred_check
    _
  $region7: #{vae_forward.10} parent=0 // pred_check_branch
    %11 = sbr.rel (0) target = $region9
  $region8: #{vae_forward.10} parent=0 // pred_region
    _
  $region9: #{vae_forward.10} parent=0 // pred_fallthru
    _
  // Predicated region
  $region10: #{vae_forward.10} parent=0 // pred_check
    _
  $region11: #{vae_forward.10} parent=0 // pred_check_branch
    %13 = sbr.rel (0) target = $region13
  $region12: #{vae_forward.10} parent=0 // pred_region
    _
  $region13: #{vae_forward.10} parent=0 // pred_fallthru
    _
  %v15 = vld [vmem:[%s0] sm:$0xff]
  %v16 = vld [vmem:[%s0 + $0x8] sm:$0xff]
  %v17 = vld [vmem:[%s0 + $0x10] sm:$0xff]
  %v18 = vld [vmem:[%s0 + $0x18] sm:$0xff]
  %v19 = vld [vmem:[%s0 + $0x20] sm:$0xff]
  %v20 = vld [vmem:[%s0 + $0x28] sm:$0xff]
  %v21 = vld [vmem:[%s1] sm:$0xf]
  %v22 = vld [vmem:[%s1 + $0x4] sm:$0xf]
  %v23 = vld [vmem:[%s1 + $0x8] sm:$0xf]
  %v24 = vld [vmem:[%s1 + $0xc] sm:$0xf]
  %v25 = vld [vmem:[%s1 + $0x10] sm:$0xf]
  %v26 = vld [vmem:[%s1 + $0x14] sm:$0xf]
  %v27 = vld [vmem:[%s1 + $0x18] sm:$0xf]
  %v28 = vld [vmem:[%s1 + $0x1c] sm:$0xf]
  %v29 = vld [vmem:[%s1 + $0x20] sm:$0xf]
  %v30 = vld [vmem:[%s1 + $0x24] sm:$0xf]
  %v31 = vld [vmem:[%s1 + $0x28] sm:$0xf]
  %v32 = vld [vmem:[%s1 + $0x2c] sm:$0xf]
  %v33 = vld [vmem:[%s1 + $0x30] sm:$0xf]
  %v34 = vld [vmem:[%s1 + $0x34] sm:$0xf]
  %v35 = vld [vmem:[%s1 + $0x38] sm:$0xf]
  %v36 = vld [vmem:[%s1 + $0x3c] sm:$0xf]
  %v37 = vld [vmem:[%s1 + $0x40] sm:$0xf]
  %v38 = vld [vmem:[%s1 + $0x44] sm:$0xf]
  %v39 = vld [vmem:[%s1 + $0x48] sm:$0xf]
  %v40 = vld [vmem:[%s1 + $0x4c] sm:$0xf]
  %v41 = vld [vmem:[%s1 + $0x50] sm:$0xf]
  %v42 = vld [vmem:[%s1 + $0x54] sm:$0xf]
  %v43 = vld [vmem:[%s1 + $0x58] sm:$0xf]
  %v44 = vld [vmem:[%s1 + $0x5c] sm:$0xf]
  %v45 = vld [vmem:[%s1 + $0x60] sm:$0xf]
  %v46 = vld [vmem:[%s1 + $0x64] sm:$0xf]
  %v47 = vld [vmem:[%s1 + $0x68] sm:$0xf]
  %v48 = vld [vmem:[%s2] sm:$0xff]
  %v49 = vld [vmem:[%s2 + $0x8] sm:$0xff]
  %v50 = vld [vmem:[%s2 + $0x10] sm:$0xff]
  %v51 = vld [vmem:[%s2 + $0x18] sm:$0xff]
  %v52 = vld [vmem:[%s2 + $0x20] sm:$0xff]
  %v53 = vld [vmem:[%s2 + $0x28] sm:$0xff]
  %55 = vset.pattern.permute.xlu0 0
  %56 = vperm.xlu0 %55, %v48
  %v57 = vpop.permute.xlu0 %56
  %60 = vset.pattern.permute.xlu0 0
  %61 = vperm.xlu0 %60, %v49
  %v62 = vpop.permute.xlu0 %61
  %65 = vset.pattern.permute.xlu0 0
  %66 = vperm.xlu0 %65, %v50
  %v67 = vpop.permute.xlu0 %66
  %70 = vset.pattern.permute.xlu0 0
  %71 = vperm.xlu0 %70, %v51
  %v72 = vpop.permute.xlu0 %71
  %75 = vset.pattern.permute.xlu0 0
  %76 = vperm.xlu0 %75, %v52
  %v77 = vpop.permute.xlu0 %76
  %80 = vset.pattern.permute.xlu0 0
  %81 = vperm.xlu0 %80, %v53
  %v82 = vpop.permute.xlu0 %81
  %v90 = vunpack.c.l.b16 %v15
  %v91 = vunpack.c.h.b16 %v15
  %v92 = vunpack.c.l.b16 %v16
  %v93 = vunpack.c.h.b16 %v16
  %v94 = vunpack.c.l.b16 %v17
  %v95 = vunpack.c.h.b16 %v17
  %v96 = vunpack.c.l.b16 %v18
  %v97 = vunpack.c.h.b16 %v18
  %v98 = vunpack.c.l.b16 %v19
  %v99 = vunpack.c.h.b16 %v19
  %v100 = vunpack.c.l.b16 %v20
  %v101 = vunpack.c.h.b16 %v20
  %v102 = vpack.c.b16 %v92, %v90
  %v103 = vpack.c.b16 %v93, %v91
  %v104 = vpack.c.b16 %v96, %v94
  %v105 = vpack.c.b16 %v97, %v95
  %v106 = vpack.c.b16 %v100, %v98
  %v107 = vpack.c.b16 %v101, %v99
  %v138 = vunpack.c.l.b16 %v21
  %v139 = vunpack.c.l.b16 %v22
  %v140 = vunpack.c.l.b16 %v23
  %v141 = vunpack.c.l.b16 %v24
  %v142 = vunpack.c.l.b16 %v25
  %v143 = vunpack.c.l.b16 %v26
  %v144 = vunpack.c.l.b16 %v27
  %v145 = vunpack.c.l.b16 %v28
  %v146 = vunpack.c.l.b16 %v29
  %v147 = vunpack.c.l.b16 %v30
  %v148 = vunpack.c.l.b16 %v31
  %v149 = vunpack.c.l.b16 %v32
  %v150 = vunpack.c.l.b16 %v33
  %v151 = vunpack.c.l.b16 %v34
  %v152 = vunpack.c.l.b16 %v35
  %v153 = vunpack.c.l.b16 %v36
  %v154 = vunpack.c.l.b16 %v37
  %v155 = vunpack.c.l.b16 %v38
  %v156 = vunpack.c.l.b16 %v39
  %v157 = vunpack.c.l.b16 %v40
  %v158 = vunpack.c.l.b16 %v41
  %v159 = vunpack.c.l.b16 %v42
  %v160 = vunpack.c.l.b16 %v43
  %v161 = vunpack.c.l.b16 %v44
  %v162 = vunpack.c.l.b16 %v45
  %v163 = vunpack.c.l.b16 %v46
  %v164 = vunpack.c.l.b16 %v47
  %v165 = vpack.c.b16 %v139, %v138
  %v166 = vpack.c.b16 %v141, %v140
  %v167 = vpack.c.b16 %v143, %v142
  %v168 = vpack.c.b16 %v145, %v144
  %v169 = vpack.c.b16 %v147, %v146
  %v170 = vpack.c.b16 %v149, %v148
  %v171 = vpack.c.b16 %v151, %v150
  %v172 = vpack.c.b16 %v153, %v152
  %v173 = vpack.c.b16 %v155, %v154
  %v174 = vpack.c.b16 %v157, %v156
  %v175 = vpack.c.b16 %v159, %v158
  %v176 = vpack.c.b16 %v161, %v160
  %v177 = vpack.c.b16 %v163, %v162
  %v178 = vpack.c.b16 %v164, %v164
  %vm192 = vcmask 719872
  %v194 = vsel %vm192, %v103, 0
  %v197 = vsel %vm192, %v105, 0
  %v200 = vsel %vm192, %v107, 0
  %vm202 = vcmask 1043456
  %v204 = vsel %vm202, %v178, 0
  %206 = vmatprep.subr.bf16.mxu0 0
  %207 = vmatpush1.bf16.msra.mxu0 %v165
  %208 = vmatprep.subr.bf16.mxu0 0
  %209 = vmatpush1.bf16.msra.mxu0 %v166
  %210 = vmatprep.subr.bf16.mxu0 0
  %211 = vmatpush1.bf16.msra.mxu0 %v167
  %212 = vmatprep.subr.bf16.mxu0 0
  %213 = vmatpush1.bf16.msra.mxu0 %v168
  %214 = vmatprep.subr.bf16.mxu0 0
  %215 = vmatpush1.bf16.msra.mxu0 %v169
  %216 = vmatprep.subr.bf16.mxu0 0
  %217 = vmatpush1.bf16.msra.mxu0 %v170
  %218 = vmatprep.subr.bf16.mxu0 0
  %219 = vmatpush1.bf16.msra.mxu0 %v171
  %220 = vmatprep.subr.bf16.mxu0 0
  %221 = vmatpush1.bf16.msra.mxu0 %v172
  %222 = vmatprep.subr.bf16.mxu0 0
  %223 = vmatpush1.bf16.msra.mxu0 %v173
  %224 = vmatprep.subr.bf16.mxu0 0
  %225 = vmatpush1.bf16.msra.mxu0 %v174
  %226 = vmatprep.subr.bf16.mxu0 0
  %227 = vmatpush1.bf16.msra.mxu0 %v175
  %228 = vmatprep.subr.bf16.mxu0 0
  %229 = vmatpush1.bf16.msra.mxu0 %v176
  %230 = vmatprep.subr.bf16.mxu0 0
  %231 = vmatpush1.bf16.msra.mxu0 %v177
  %232 = vmatprep.subr.bf16.mxu0 0
  %233 = vmatpush1.bf16.msra.mxu0 %v204
  %234 = vmatprep.subr.bf16.mxu0 0
  %235 = vmatpush1.bf16.msra.mxu0 0
  %236 = vmatprep.subr.bf16.mxu0 0
  %237 = vmatpush1.bf16.msra.mxu0 0
  %238 = vmatprep.mubr.bf16.mxu0 %v194
  %239 = vmatmul.mubr.bf16.gmra.mrb[0].mxu0 %v102
  %v240 = vpop.f32.mrb[0].mxu0
  %v241 = vadd.f32 %v57, %v240
  %v242 = vpop.f32.mrb[0].mxu0
  %v243 = vpop.f32.mrb[0].mxu0
  %v244 = vadd.f32 %v62, %v243
  %v245 = vpop.f32.mrb[0].mxu0
  %246 = vmatprep.mubr.bf16.mxu0 %v197
  %247 = vmatmul.mubr.bf16.gmra.mrb[0].mxu0 %v104
  %v248 = vpop.f32.mrb[0].mxu0
  %v249 = vadd.f32 %v67, %v248
  %v250 = vpop.f32.mrb[0].mxu0
  %v251 = vpop.f32.mrb[0].mxu0
  %v252 = vadd.f32 %v72, %v251
  %v253 = vpop.f32.mrb[0].mxu0
  %254 = vmatprep.mubr.bf16.mxu0 %v200
  %255 = vmatmul.mubr.bf16.gmra.mrb[0].mxu0 %v106
  %v256 = vpop.f32.mrb[0].mxu0
  %v257 = vadd.f32 %v77, %v256
  %v258 = vpop.f32.mrb[0].mxu0
  %v259 = vpop.f32.mrb[0].mxu0
  %v260 = vadd.f32 %v82, %v259
  %v261 = vpop.f32.mrb[0].mxu0
  %262 = vdwg.mxu0
  %v263 = vmax.f32 %v241, 0.0
  %v264 = vmax.f32 %v244, 0.0
  %v265 = vmax.f32 %v249, 0.0
  %v266 = vmax.f32 %v252, 0.0
  %v267 = vmax.f32 %v257, 0.0
  %v268 = vmax.f32 %v260, 0.0
  %vm269 = vcmask 261120
  %270 = vst.msk [vmem:[%s3] sm:$0xff] %vm269, %v263
  %271 = vst.msk [vmem:[%s3 + $0x8] sm:$0xff] %vm269, %v264
  %272 = vst.msk [vmem:[%s3 + $0x10] sm:$0xff] %vm269, %v265
  %273 = vst.msk [vmem:[%s3 + $0x18] sm:$0xff] %vm269, %v266
  %274 = vst.msk [vmem:[%s3 + $0x20] sm:$0xff] %vm269, %v267
  %275 = vst.msk [vmem:[%s3 + $0x28] sm:$0xff] %vm269, %v268
  // Predicated region
  $region14: #{vae_forward.10} parent=0 // pred_check
    _
  $region15: #{vae_forward.10} parent=0 // pred_check_branch
    %277 = sbr.rel (0) target = $region17
  $region16: #{vae_forward.10} parent=0 // pred_region
    _
  $region17: #{vae_forward.10} parent=0 // pred_fallthru
    _
  // Predicated region
  $region18: #{vae_forward.10} parent=0 // pred_check
    _
  $region19: #{vae_forward.10} parent=0 // pred_check_branch
    %279 = sbr.rel (0) target = $region21
  $region20: #{vae_forward.10} parent=0 // pred_region
    _
  $region21: #{vae_forward.10} parent=0 // pred_fallthru
    _

// kernel: tile.28
$region0: #{tile.28}
  #allocation0 [shape = 's32[1]{0}', space=sflag, size = 0x4, scoped, tag = 'scoped memory for tile.28']
  %s0 = inlined_call_operand.vmem [shape: f32[3], index: 0, kind: input, shape index: {}]
  %s1 = inlined_call_operand.vmem [shape: f32[4,3], index: 1, kind: output, shape index: {}]
  // Predicated region
  $region2: #{tile.28} parent=0 // pred_check
    _
  $region3: #{tile.28} parent=0 // pred_check_branch
    %3 = sbr.rel (0) target = $region5
  $region4: #{tile.28} parent=0 // pred_region
    _
  $region5: #{tile.28} parent=0 // pred_fallthru
    _
  %v4 = vld [vmem:[%s0] ss:$0 sm:$0xff]
  %5 = vst [vmem:[%s1] sm:$0xf] %v4

// kernel: tile.2
$region0: #{tile.2}
  %s0 = inlined_call_operand.vmem [shape: f32[4,3], index: 0, kind: input, shape index: {}]
  %s1 = inlined_call_operand.vmem [shape: f32[12,1], index: 1, kind: output, shape index: {}]
  $region1: #{tile.2} parent=0
    #allocation0 [shape = 'u8[4096]{0}', space=vmem, size = 0x1000, scoped, tag = 'scoped mem for input reshape']
    %s3 = sshllo.u32 0, 4
    %v4 = vld [vmem:[%s0] sm:%s3]
    %5 = vst [vmem:[#allocation0] sm:%s3] %v4
    %v6 = vld [vmem:[#allocation0] sm:$0xf]
    %vm7 = vcmask 7168
    %8 = vst.msk [vmem:[%s1] ss:$3 sm:$0xf] %vm7, %v6
    %v9 = vld [vmem:[#allocation0] sm:$0xf]
    %10 = vrot.lane.b32.xlu0 %v9, 127
    %v11 = vpop.permute.xlu0 %10
    %vm12 = vcmask 7168
    %s13 = scalar_lea.vmem %s1, 1
    %14 = vst.msk [vmem:[%s13] ss:$3 sm:$0xf] %vm12, %v11
    %v15 = vld [vmem:[#allocation0] sm:$0xf]
    %16 = vrot.lane.b32.xlu0 %v15, 126
    %v17 = vpop.permute.xlu0 %16
    %vm18 = vcmask 7168
    %s19 = scalar_lea.vmem %s1, 2
    %20 = vst.msk [vmem:[%s19] ss:$3 sm:$0xf] %vm18, %v17

// kernel: vae_forward.11
$region0: #{vae_forward.11}
  #allocation0 [shape = 'u32[]', space=smem, size = 0x4, offset = 0x4, fixed_abs, tag = 'smem constant byte address 0x4 - core index']
  #allocation1 [shape = 'u32[144,128]{1,0:T(1,128)}', space=vmem, size = 0x12000, scoped, tag = 'internal scratch']
  %s0 = inlined_call_operand.vmem [shape: bf16[12,108], index: 0, kind: input, shape index: {}]
  %s1 = inlined_call_operand.vmem [shape: bf16[108,128], index: 1, kind: input, shape index: {}]
  %s2 = inlined_call_operand.vmem [shape: f32[12,1], index: 2, kind: input, shape index: {}]
  %s3 = inlined_call_operand.vmem [shape: f32[12,128], index: 3, kind: output, shape index: {}]
  %s4 = sld [smem:[#allocation0]]
  $region22: #{vae_forward.11} parent=0
    _
  %s6 = ssub.s32 1, %s4
  %s7 = scalar_select 0, %s6, %s4
  // Predicated region
  $region2: #{vae_forward.11} parent=0 // pred_check
    _
  $region3: #{vae_forward.11} parent=0 // pred_check_branch
    %9 = sbr.rel (0) target = $region5
  $region4: #{vae_forward.11} parent=0 // pred_region
    _
  $region5: #{vae_forward.11} parent=0 // pred_fallthru
    _
  // Predicated region
  $region6: #{vae_forward.11} parent=0 // pred_check
    _
  $region7: #{vae_forward.11} parent=0 // pred_check_branch
    %11 = sbr.rel (0) target = $region9
  $region8: #{vae_forward.11} parent=0 // pred_region
    _
  $region9: #{vae_forward.11} parent=0 // pred_fallthru
    _
  // Predicated region
  $region10: #{vae_forward.11} parent=0 // pred_check
    _
  $region11: #{vae_forward.11} parent=0 // pred_check_branch
    %13 = sbr.rel (0) target = $region13
  $region12: #{vae_forward.11} parent=0 // pred_region
    _
  $region13: #{vae_forward.11} parent=0 // pred_fallthru
    _
  %v15 = vld [vmem:[%s0] sm:$0xf]
  %v16 = vld [vmem:[%s0 + $0x4] sm:$0x3]
  %v17 = vld [vmem:[%s1] sm:$0xf]
  %v18 = vld [vmem:[%s1 + $0x4] sm:$0xf]
  %v19 = vld [vmem:[%s1 + $0x8] sm:$0xf]
  %v20 = vld [vmem:[%s1 + $0xc] sm:$0xf]
  %v21 = vld [vmem:[%s1 + $0x10] sm:$0xf]
  %v22 = vld [vmem:[%s1 + $0x14] sm:$0xf]
  %v23 = vld [vmem:[%s1 + $0x18] sm:$0xf]
  %v24 = vld [vmem:[%s1 + $0x1c] sm:$0xf]
  %v25 = vld [vmem:[%s1 + $0x20] sm:$0xf]
  %v26 = vld [vmem:[%s1 + $0x24] sm:$0xf]
  %v27 = vld [vmem:[%s1 + $0x28] sm:$0xf]
  %v28 = vld [vmem:[%s1 + $0x2c] sm:$0xf]
  %v29 = vld [vmem:[%s1 + $0x30] sm:$0xf]
  %v30 = vld [vmem:[%s1 + $0x34] sm:$0x3]
  %v31 = vld [vmem:[%s2] sm:$0xff]
  %v32 = vld [vmem:[%s2 + $0x8] sm:$0xf]
  %34 = vset.pattern.permute.xlu0 0
  %35 = vperm.xlu0 %34, %v31
  %v36 = vpop.permute.xlu0 %35
  %39 = vset.pattern.permute.xlu0 0
  %40 = vperm.xlu0 %39, %v32
  %v41 = vpop.permute.xlu0 %40
  %v45 = vunpack.c.l.b16 %v15
  %v46 = vunpack.c.l.b16 %v16
  %v47 = vpack.c.b16 %v46, %v45
  %v62 = vunpack.c.l.b16 %v17
  %v63 = vunpack.c.l.b16 %v18
  %v64 = vunpack.c.l.b16 %v19
  %v65 = vunpack.c.l.b16 %v20
  %v66 = vunpack.c.l.b16 %v21
  %v67 = vunpack.c.l.b16 %v22
  %v68 = vunpack.c.l.b16 %v23
  %v69 = vunpack.c.l.b16 %v24
  %v70 = vunpack.c.l.b16 %v25
  %v71 = vunpack.c.l.b16 %v26
  %v72 = vunpack.c.l.b16 %v27
  %v73 = vunpack.c.l.b16 %v28
  %v74 = vunpack.c.l.b16 %v29
  %v75 = vunpack.c.l.b16 %v30
  %v76 = vpack.c.b16 %v63, %v62
  %v77 = vpack.c.b16 %v65, %v64
  %v78 = vpack.c.b16 %v67, %v66
  %v79 = vpack.c.b16 %v69, %v68
  %v80 = vpack.c.b16 %v71, %v70
  %v81 = vpack.c.b16 %v73, %v72
  %v82 = vpack.c.b16 %v75, %v74
  %vm89 = vcmask 883712
  %v91 = vsel %vm89, %v47, 0
  %vm93 = vcmask 1045504
  %v95 = vsel %vm93, %v82, 0
  %97 = vmatprep.subr.bf16.mxu0 0
  %98 = vmatpush1.bf16.msra.mxu0 %v76
  %99 = vmatprep.subr.bf16.mxu0 0
  %100 = vmatpush1.bf16.msra.mxu0 %v77
  %101 = vmatprep.subr.bf16.mxu0 0
  %102 = vmatpush1.bf16.msra.mxu0 %v78
  %103 = vmatprep.subr.bf16.mxu0 0
  %104 = vmatpush1.bf16.msra.mxu0 %v79
  %105 = vmatprep.subr.bf16.mxu0 0
  %106 = vmatpush1.bf16.msra.mxu0 %v80
  %107 = vmatprep.subr.bf16.mxu0 0
  %108 = vmatpush1.bf16.msra.mxu0 %v81
  %109 = vmatprep.subr.bf16.mxu0 0
  %110 = vmatpush1.bf16.msra.mxu0 %v95
  %111 = vmatprep.subr.bf16.mxu0 0
  %112 = vmatpush1.bf16.msra.mxu0 0
  %113 = vmatprep.subr.bf16.mxu0 0
  %114 = vmatpush1.bf16.msra.mxu0 0
  %115 = vmatprep.subr.bf16.mxu0 0
  %116 = vmatpush1.bf16.msra.mxu0 0
  %117 = vmatprep.subr.bf16.mxu0 0
  %118 = vmatpush1.bf16.msra.mxu0 0
  %119 = vmatprep.subr.bf16.mxu0 0
  %120 = vmatpush1.bf16.msra.mxu0 0
  %121 = vmatprep.subr.bf16.mxu0 0
  %122 = vmatpush1.bf16.msra.mxu0 0
  %123 = vmatprep.subr.bf16.mxu0 0
  %124 = vmatpush1.bf16.msra.mxu0 0
  %125 = vmatprep.subr.bf16.mxu0 0
  %126 = vmatpush1.bf16.msra.mxu0 0
  %127 = vmatprep.subr.bf16.mxu0 0
  %128 = vmatpush1.bf16.msra.mxu0 0
  %129 = vmatprep.mubr.bf16.mxu0 0
  %130 = vmatmul.mubr.bf16.gmra.mrb[0].mxu0 %v91
  %v131 = vpop.f32.mrb[0].mxu0
  %v132 = vadd.f32 %v36, %v131
  %v133 = vpop.f32.mrb[0].mxu0
  %v134 = vpop.f32.mrb[0].mxu0
  %v135 = vadd.f32 %v41, %v134
  %v136 = vpop.f32.mrb[0].mxu0
  %137 = vdwg.mxu0
  %v138 = vtanh.pop %v132
  %v139 = vtanh.pop %v135
  %140 = vst [vmem:[%s3] sm:$0xff] %v138
  %141 = vst [vmem:[%s3 + $0x8] sm:$0xf] %v139
  // Predicated region
  $region14: #{vae_forward.11} parent=0 // pred_check
    _
  $region15: #{vae_forward.11} parent=0 // pred_check_branch
    %143 = sbr.rel (0) target = $region17
  $region16: #{vae_forward.11} parent=0 // pred_region
    _
  $region17: #{vae_forward.11} parent=0 // pred_fallthru
    _
  // Predicated region
  $region18: #{vae_forward.11} parent=0 // pred_check
    _
  $region19: #{vae_forward.11} parent=0 // pred_check_branch
    %145 = sbr.rel (0) target = $region21
  $region20: #{vae_forward.11} parent=0 // pred_region
    _
  $region21: #{vae_forward.11} parent=0 // pred_fallthru
    _

</llo_original>
